<compile_context>
chip_gen: v6e
topology: v6e:2x2x1
jax: 0.10.0
libtpu: 0.0.40
codegen_flags: <defaults>
</compile_context>

<pallas_src>
import functools
import math

import jax
import jax.numpy as jnp
from jax import lax
from jax.experimental import pallas as pl
from jax.experimental.pallas import tpu as pltpu


def _make_multi_attn_kernel(block_B, len_k, len_q, len_v,
                            dim_k, dim_v, num_head, attn_lane_dense):
    hdk = num_head * dim_k
    scale = 1.0 / math.sqrt(dim_k)
    inv_len_v = 1.0 / len_v

    def kernel(key_ref, query_ref, value_ref, w_kq_ref, w_v_ref,
               attn_v_ref, attn_ref):
        # Kernel views (batch folded into rows):
        #   key_ref    (block_B*Lk, d_in_k)   bf16
        #   query_ref  (block_B*Lq, d_in_k)   bf16
        #   value_ref  (block_B*Lv, d_in_v)   bf16
        #   w_kq_ref   (d_in_k, 2*H*dk)       bf16  [W_k | W_q]
        #   w_v_ref    (d_in_v, H*dv)         bf16
        #   attn_v_ref (block_B*Lq, H*dv)     f32
        #   attn_ref   (Lq, block_B*H*Lk) f32 if attn_lane_dense
        #              (block_B*Lq, H*Lk) f32 otherwise

        # Wide bf16 MXU projections for the whole batch block, f32 accumulate.
        k_all = jnp.dot(key_ref[...], w_kq_ref[:, :hdk],
                        preferred_element_type=jnp.float32)            # (bLk, H*dk)
        q_all = jnp.dot(query_ref[...], w_kq_ref[:, hdk:],
                        preferred_element_type=jnp.float32) * scale    # (bLq, H*dk)
        # Fold the mean-over-keys 1/Lv into v once; bf16 copy for the MXU.
        v_all = (jnp.dot(value_ref[...], w_v_ref[...],
                         preferred_element_type=jnp.float32)
                 * inv_len_v).astype(jnp.bfloat16)                     # (bLv, H*dv)

        # q @ k^T without materializing a transpose (contract last dims).
        dn = (((1,), (1,)), ((), ()))

        for b in range(block_B):            # small static loops
            q_b = q_all[b * len_q:(b + 1) * len_q, :]
            k_b = k_all[b * len_k:(b + 1) * len_k, :]
            v_b = v_all[b * len_v:(b + 1) * len_v, :]
            for h in range(num_head):
                q_h = q_b[:, h * dim_k:(h + 1) * dim_k]
                k_h = k_b[:, h * dim_k:(h + 1) * dim_k]
                v_h = v_b[:, h * dim_v:(h + 1) * dim_v]

                scores = lax.dot_general(q_h, k_h, dn,
                                         preferred_element_type=jnp.float32)
                scores = scores - jnp.max(scores, axis=-1, keepdims=True)
                e = jnp.exp(scores)
                inv_denom = pl.reciprocal(jnp.sum(e, axis=-1, keepdims=True))
                probs = e * inv_denom                                  # (Lq, Lk) f32

                if attn_lane_dense:
                    c0 = (b * num_head + h) * len_k
                    attn_ref[:, c0:c0 + len_k] = probs
                else:
                    attn_ref[b * len_q:(b + 1) * len_q,
                             h * len_k:(h + 1) * len_k] = probs

                out_h = jnp.dot(probs.astype(jnp.bfloat16), v_h,
                                preferred_element_type=jnp.float32)    # (Lq, dv)
                attn_v_ref[b * len_q:(b + 1) * len_q,
                           h * dim_v:(h + 1) * dim_v] = out_h

    return kernel


@functools.partial(jax.jit,
                   static_argnames=("dim_k", "dim_v", "num_head",
                                    "num_batch_blocks"))
def multi_attn_forward(key, query, value, w_k, w_q, w_v, *,
                       dim_k, dim_v, num_head, num_batch_blocks=1):
    """Fused Multi_Attn forward.  num_batch_blocks=1 (default) folds the whole
    batch into one grid step (best on v5e/v6e); set 2 on v7x to shard across
    the two TensorCores."""
    B, len_k, d_in_k = key.shape
    len_q = query.shape[1]
    len_v, d_in_v = value.shape[1], value.shape[2]
    assert len_k == len_v, "module's elementwise attn*v requires len_k == len_v"
    assert B % num_batch_blocks == 0
    block_B = B // num_batch_blocks
    hdk = num_head * dim_k
    hdv = num_head * dim_v
    assert w_k.shape == (d_in_k, hdk) and w_q.shape == (d_in_k, hdk)
    assert w_v.shape == (d_in_v, hdv)

    # bf16 MXU operands (halves input/weight DMA bytes); f32 accumulation and
    # f32 stored outputs inside the kernel.
    key2 = key.reshape(B * len_k, d_in_k).astype(jnp.bfloat16)
    query2 = query.reshape(B * len_q, d_in_k).astype(jnp.bfloat16)
    value2 = value.reshape(B * len_v, d_in_v).astype(jnp.bfloat16)
    w_kq = jnp.concatenate([w_k, w_q], axis=1).astype(jnp.bfloat16)
    w_v_b = w_v.astype(jnp.bfloat16)

    # Lane-dense attn layout ((Lq, B*H*Lk)) only valid when batch isn't split.
    attn_lane_dense = (num_batch_blocks == 1)
    if attn_lane_dense:
        attn_shape = (len_q, B * num_head * len_k)
        attn_spec = pl.BlockSpec((len_q, B * num_head * len_k),
                                 lambda i: (0, 0))
    else:
        attn_shape = (B * len_q, num_head * len_k)
        attn_spec = pl.BlockSpec((block_B * len_q, num_head * len_k),
                                 lambda i: (i, 0))

    kernel = _make_multi_attn_kernel(block_B, len_k, len_q, len_v,
                                     dim_k, dim_v, num_head, attn_lane_dense)

    # Advisory cost estimate for the XLA scheduler.
    flops = int(2 * B * (len_k * d_in_k * hdk + len_q * d_in_k * hdk
                         + len_v * d_in_v * hdv)
                + 2 * B * num_head * (len_q * dim_k * len_k
                                      + len_q * len_k * dim_v))
    transcendentals = int(B * num_head * len_q * len_k)
    bytes_accessed = int(2 * (key2.size + query2.size + value2.size
                              + w_kq.size + w_v_b.size)
                         + 4 * (B * len_q * hdv
                                + B * num_head * len_q * len_k))

    attn_v_wide, attn_wide = pl.pallas_call(
        kernel,
        out_shape=(
            jax.ShapeDtypeStruct((B * len_q, hdv), jnp.float32),
            jax.ShapeDtypeStruct(attn_shape, jnp.float32),
        ),
        grid=(num_batch_blocks,),
        in_specs=[
            pl.BlockSpec((block_B * len_k, d_in_k), lambda i: (i, 0)),
            pl.BlockSpec((block_B * len_q, d_in_k), lambda i: (i, 0)),
            pl.BlockSpec((block_B * len_v, d_in_v), lambda i: (i, 0)),
            # Weights: constant block index -> stay resident, no per-step DMA.
            pl.BlockSpec((d_in_k, 2 * hdk), lambda i: (0, 0)),
            pl.BlockSpec((d_in_v, hdv), lambda i: (0, 0)),
        ],
        out_specs=(
            pl.BlockSpec((block_B * len_q, hdv), lambda i: (i, 0)),
            attn_spec,
        ),
        compiler_params=pltpu.CompilerParams(
            dimension_semantics=("parallel",)),
        cost_estimate=pl.CostEstimate(flops=flops,
                                      transcendentals=transcendentals,
                                      bytes_accessed=bytes_accessed),
    )(key2, query2, value2, w_kq, w_v_b)

    attn_v = attn_v_wide.reshape(B, len_q, hdv)
    if attn_lane_dense:
        attn = attn_wide.reshape(len_q, B, num_head, len_k).transpose(1, 2, 0, 3)
    else:
        attn = attn_wide.reshape(B, len_q, num_head, len_k).transpose(0, 2, 1, 3)
    return attn_v, attn


def reference_forward(key, query, value, w_k, w_q, w_v, dim_k, dim_v, num_head):
    """Pure-JAX (f32) mirror of the PyTorch Multi_Attn.forward; weights (in, out)."""
    B, len_k, _ = key.shape
    len_q = query.shape[1]
    len_v = value.shape[1]
    k = (key @ w_k).reshape(B, len_k, num_head, dim_k).transpose(0, 2, 1, 3)
    q = (query @ w_q).reshape(B, len_q, num_head, dim_k).transpose(0, 2, 1, 3)
    v = (value @ w_v).reshape(B, len_v, num_head, dim_v).transpose(0, 2, 1, 3)
    attn = jax.nn.softmax(
        jnp.einsum("bhqd,bhkd->bhqk", q / math.sqrt(dim_k), k), axis=-1)
    emb = jnp.einsum("bhqk,bhkd->bhqd", attn, v) / len_v       # mean over keys
    attn_v = emb.transpose(0, 2, 1, 3).reshape(B, len_q, num_head * dim_v)
    return attn_v, attn


if __name__ == "__main__":
    # Small shapes consistent with the module (cross-attention: Lq != Lk).
    B, len_q, len_kv = 2, 8, 16
    d_in_k, d_in_v = 16, 24
    dim_k, dim_v, num_head = 16, 16, 4

    rng = jax.random.PRNGKey(0)
    r_k, r_q, r_v, r_wk, r_wq, r_wv = jax.random.split(rng, 6)
    key_t = jax.random.normal(r_k, (B, len_kv, d_in_k), jnp.float32)
    query_t = jax.random.normal(r_q, (B, len_q, d_in_k), jnp.float32)
    value_t = jax.random.normal(r_v, (B, len_kv, d_in_v), jnp.float32)

    w_k = jax.random.normal(r_wk, (d_in_k, num_head * dim_k), jnp.float32) * 0.1
    w_q = jax.random.normal(r_wq, (d_in_k, num_head * dim_k), jnp.float32) * 0.1
    w_v = jax.random.normal(r_wv, (d_in_v, num_head * dim_v), jnp.float32) * 0.1

    ref_attn_v, ref_attn = reference_forward(key_t, query_t, value_t,
                                             w_k, w_q, w_v,
                                             dim_k, dim_v, num_head)

    # Default path: batch folded into a single grid step (v5e/v6e optimum).
    attn_v, attn = multi_attn_forward(key_t, query_t, value_t, w_k, w_q, w_v,
                                      dim_k=dim_k, dim_v=dim_v,
                                      num_head=num_head)
    jax.block_until_ready((attn_v, attn))
    # bf16 MXU operands -> loosened tolerance (attn probs still computed/stored f32).
    assert jnp.allclose(attn_v, ref_attn_v, atol=2e-2, rtol=2e-2)
    assert jnp.allclose(attn, ref_attn, atol=2e-2, rtol=2e-2)

    # v7x path: 2-way "parallel" batch split so both TensorCores are used.
    attn_v2, attn2 = multi_attn_forward(key_t, query_t, value_t, w_k, w_q, w_v,
                                        dim_k=dim_k, dim_v=dim_v,
                                        num_head=num_head, num_batch_blocks=2)
    jax.block_until_ready((attn_v2, attn2))
    assert jnp.allclose(attn_v2, ref_attn_v, atol=2e-2, rtol=2e-2)
    assert jnp.allclose(attn2, ref_attn, atol=2e-2, rtol=2e-2)

    print("KERNEL_OK")
</pallas_src>

<mosaic_0001>
module attributes {stable_mosaic.version = 11 : i64} {
  func.func @kernel(%arg0: i32, %arg1: memref<32x16xbf16, #tpu.memory_space<vmem>>, %arg2: memref<16x16xbf16, #tpu.memory_space<vmem>>, %arg3: memref<32x24xbf16, #tpu.memory_space<vmem>>, %arg4: memref<16x128xbf16, #tpu.memory_space<vmem>>, %arg5: memref<24x64xbf16, #tpu.memory_space<vmem>>, %arg6: memref<16x64xf32, #tpu.memory_space<vmem>>, %arg7: memref<8x128xf32, #tpu.memory_space<vmem>>) attributes {dimension_semantics = [#tpu.dimension_semantics<parallel>], iteration_bounds = array<i64: 1>, scalar_prefetch = 0 : i64, scratch_operands = 0 : i64, tpu.core_type = #tpu.core_type<tc>, window_params = [{transform_indices = @transform_0, window_bounds = array<i64: 32, 16>}, {transform_indices = @transform_1, window_bounds = array<i64: 16, 16>}, {transform_indices = @transform_2, window_bounds = array<i64: 32, 24>}, {pipeline_mode = #tpu.pipeline_mode<synchronous>, transform_indices = @transform_3, window_bounds = array<i64: 16, 128>}, {pipeline_mode = #tpu.pipeline_mode<synchronous>, transform_indices = @transform_4, window_bounds = array<i64: 24, 64>}, {transform_indices = @transform_5, window_bounds = array<i64: 16, 64>}, {pipeline_mode = #tpu.pipeline_mode<synchronous>, transform_indices = @transform_6, window_bounds = array<i64: 8, 128>}]} {
    %c0 = arith.constant 0 : index
    %c0_0 = arith.constant 0 : index
    %0 = vector.load %arg1[%c0, %c0_0] : memref<32x16xbf16, #tpu.memory_space<vmem>>, vector<32x16xbf16>
    %c0_1 = arith.constant 0 : index
    %c0_2 = arith.constant 0 : index
    %1 = vector.load %arg4[%c0_1, %c0_2] : memref<16x128xbf16, #tpu.memory_space<vmem>>, vector<16x64xbf16>
    %cst = arith.constant dense<0.000000e+00> : vector<32x64xf32>
    %2 = tpu.matmul %0, %1, %cst {dimension_numbers = #tpu.dot_dimension_numbers<[1], [0], [0], [1], [0, 0, 1, 1], [], []>} : vector<32x16xbf16>, vector<16x64xbf16>, vector<32x64xf32> -> vector<32x64xf32>
    %c0_3 = arith.constant 0 : index
    %c0_4 = arith.constant 0 : index
    %3 = vector.load %arg2[%c0_3, %c0_4] : memref<16x16xbf16, #tpu.memory_space<vmem>>, vector<16x16xbf16>
    %c0_5 = arith.constant 0 : index
    %c64 = arith.constant 64 : index
    %4 = vector.load %arg4[%c0_5, %c64] : memref<16x128xbf16, #tpu.memory_space<vmem>>, vector<16x64xbf16>
    %cst_6 = arith.constant dense<0.000000e+00> : vector<16x64xf32>
    %5 = tpu.matmul %3, %4, %cst_6 {dimension_numbers = #tpu.dot_dimension_numbers<[1], [0], [0], [1], [0, 0, 1, 1], [], []>} : vector<16x16xbf16>, vector<16x64xbf16>, vector<16x64xf32> -> vector<16x64xf32>
    %cst_7 = arith.constant 2.500000e-01 : f32
    %6 = vector.broadcast %cst_7 : f32 to vector<16x64xf32>
    %7 = arith.mulf %5, %6 : vector<16x64xf32>
    %c0_8 = arith.constant 0 : index
    %c0_9 = arith.constant 0 : index
    %8 = vector.load %arg3[%c0_8, %c0_9] : memref<32x24xbf16, #tpu.memory_space<vmem>>, vector<32x24xbf16>
    %c0_10 = arith.constant 0 : index
    %c0_11 = arith.constant 0 : index
    %9 = vector.load %arg5[%c0_10, %c0_11] : memref<24x64xbf16, #tpu.memory_space<vmem>>, vector<24x64xbf16>
    %cst_12 = arith.constant dense<0.000000e+00> : vector<32x64xf32>
    %10 = tpu.matmul %8, %9, %cst_12 {dimension_numbers = #tpu.dot_dimension_numbers<[1], [0], [0], [1], [0, 0, 1, 1], [], []>} : vector<32x24xbf16>, vector<24x64xbf16>, vector<32x64xf32> -> vector<32x64xf32>
    %cst_13 = arith.constant 6.250000e-02 : f32
    %11 = vector.broadcast %cst_13 : f32 to vector<32x64xf32>
    %12 = arith.mulf %10, %11 : vector<32x64xf32>
    %13 = arith.truncf %12 : vector<32x64xf32> to vector<32x64xbf16>
    %14 = vector.extract_strided_slice %7 {offsets = [0, 0], sizes = [8, 64], strides = [1, 1]} : vector<16x64xf32> to vector<8x64xf32>
    %15 = vector.extract_strided_slice %2 {offsets = [0, 0], sizes = [16, 64], strides = [1, 1]} : vector<32x64xf32> to vector<16x64xf32>
    %16 = vector.extract_strided_slice %13 {offsets = [0, 0], sizes = [16, 64], strides = [1, 1]} : vector<32x64xbf16> to vector<16x64xbf16>
    %17 = vector.extract_strided_slice %14 {offsets = [0, 0], sizes = [8, 16], strides = [1, 1]} : vector<8x64xf32> to vector<8x16xf32>
    %18 = vector.extract_strided_slice %15 {offsets = [0, 0], sizes = [16, 16], strides = [1, 1]} : vector<16x64xf32> to vector<16x16xf32>
    %19 = vector.extract_strided_slice %16 {offsets = [0, 0], sizes = [16, 16], strides = [1, 1]} : vector<16x64xbf16> to vector<16x16xbf16>
    %cst_14 = arith.constant dense<0.000000e+00> : vector<8x16xf32>
    %20 = tpu.matmul %17, %18, %cst_14 {dimension_numbers = #tpu.dot_dimension_numbers<[1], [1], [0], [0], [0, 0, 1, 0], [], []>} : vector<8x16xf32>, vector<16x16xf32>, vector<8x16xf32> -> vector<8x16xf32>
    %cst_15 = arith.constant dense<0xFF800000> : vector<8xf32>
    %21 = vector.multi_reduction <maximumf>, %20, %cst_15 [1] : vector<8x16xf32> to vector<8xf32>
    %22 = vector.shape_cast %21 : vector<8xf32> to vector<8x1xf32>
    %23 = vector.broadcast %22 : vector<8x1xf32> to vector<8x16xf32>
    %24 = arith.subf %20, %23 : vector<8x16xf32>
    %25 = math.exp %24 : vector<8x16xf32>
    %cst_16 = arith.constant dense<0.000000e+00> : vector<8xf32>
    %26 = vector.multi_reduction <add>, %25, %cst_16 [1] : vector<8x16xf32> to vector<8xf32>
    %27 = vector.shape_cast %26 : vector<8xf32> to vector<8x1xf32>
    %28 = tpu.reciprocal %27 : vector<8x1xf32> -> vector<8x1xf32>
    %29 = vector.broadcast %28 : vector<8x1xf32> to vector<8x16xf32>
    %30 = arith.mulf %25, %29 : vector<8x16xf32>
    %c0_17 = arith.constant 0 : index
    %c0_18 = arith.constant 0 : index
    %31 = vector.load %arg7[%c0_17, %c0_18] : memref<8x128xf32, #tpu.memory_space<vmem>>, vector<8x16xf32>
    tpu.vector_store %arg7[%c0_17, %c0_18], %30 {strides = array<i32>} : memref<8x128xf32, #tpu.memory_space<vmem>>, vector<8x16xf32>,
    %32 = arith.truncf %30 : vector<8x16xf32> to vector<8x16xbf16>
    %cst_19 = arith.constant dense<0.000000e+00> : vector<8x16xf32>
    %33 = tpu.matmul %32, %19, %cst_19 {dimension_numbers = #tpu.dot_dimension_numbers<[1], [0], [0], [1], [0, 0, 1, 1], [], []>} : vector<8x16xbf16>, vector<16x16xbf16>, vector<8x16xf32> -> vector<8x16xf32>
    %c0_20 = arith.constant 0 : index
    %c0_21 = arith.constant 0 : index
    %34 = vector.load %arg6[%c0_20, %c0_21] : memref<16x64xf32, #tpu.memory_space<vmem>>, vector<8x16xf32>
    tpu.vector_store %arg6[%c0_20, %c0_21], %33 {strides = array<i32>} : memref<16x64xf32, #tpu.memory_space<vmem>>, vector<8x16xf32>,
    %35 = vector.extract_strided_slice %14 {offsets = [0, 16], sizes = [8, 16], strides = [1, 1]} : vector<8x64xf32> to vector<8x16xf32>
    %36 = vector.extract_strided_slice %15 {offsets = [0, 16], sizes = [16, 16], strides = [1, 1]} : vector<16x64xf32> to vector<16x16xf32>
    %37 = vector.extract_strided_slice %16 {offsets = [0, 16], sizes = [16, 16], strides = [1, 1]} : vector<16x64xbf16> to vector<16x16xbf16>
    %cst_22 = arith.constant dense<0.000000e+00> : vector<8x16xf32>
    %38 = tpu.matmul %35, %36, %cst_22 {dimension_numbers = #tpu.dot_dimension_numbers<[1], [1], [0], [0], [0, 0, 1, 0], [], []>} : vector<8x16xf32>, vector<16x16xf32>, vector<8x16xf32> -> vector<8x16xf32>
    %cst_23 = arith.constant dense<0xFF800000> : vector<8xf32>
    %39 = vector.multi_reduction <maximumf>, %38, %cst_23 [1] : vector<8x16xf32> to vector<8xf32>
    %40 = vector.shape_cast %39 : vector<8xf32> to vector<8x1xf32>
    %41 = vector.broadcast %40 : vector<8x1xf32> to vector<8x16xf32>
    %42 = arith.subf %38, %41 : vector<8x16xf32>
    %43 = math.exp %42 : vector<8x16xf32>
    %cst_24 = arith.constant dense<0.000000e+00> : vector<8xf32>
    %44 = vector.multi_reduction <add>, %43, %cst_24 [1] : vector<8x16xf32> to vector<8xf32>
    %45 = vector.shape_cast %44 : vector<8xf32> to vector<8x1xf32>
    %46 = tpu.reciprocal %45 : vector<8x1xf32> -> vector<8x1xf32>
    %47 = vector.broadcast %46 : vector<8x1xf32> to vector<8x16xf32>
    %48 = arith.mulf %43, %47 : vector<8x16xf32>
    %c0_25 = arith.constant 0 : index
    %c16 = arith.constant 16 : index
    %49 = vector.load %arg7[%c0_25, %c16] : memref<8x128xf32, #tpu.memory_space<vmem>>, vector<8x16xf32>
    tpu.vector_store %arg7[%c0_25, %c16], %48 {strides = array<i32>} : memref<8x128xf32, #tpu.memory_space<vmem>>, vector<8x16xf32>,
    %50 = arith.truncf %48 : vector<8x16xf32> to vector<8x16xbf16>
    %cst_26 = arith.constant dense<0.000000e+00> : vector<8x16xf32>
    %51 = tpu.matmul %50, %37, %cst_26 {dimension_numbers = #tpu.dot_dimension_numbers<[1], [0], [0], [1], [0, 0, 1, 1], [], []>} : vector<8x16xbf16>, vector<16x16xbf16>, vector<8x16xf32> -> vector<8x16xf32>
    %c0_27 = arith.constant 0 : index
    %c16_28 = arith.constant 16 : index
    %52 = vector.load %arg6[%c0_27, %c16_28] : memref<16x64xf32, #tpu.memory_space<vmem>>, vector<8x16xf32>
    tpu.vector_store %arg6[%c0_27, %c16_28], %51 {strides = array<i32>} : memref<16x64xf32, #tpu.memory_space<vmem>>, vector<8x16xf32>,
    %53 = vector.extract_strided_slice %14 {offsets = [0, 32], sizes = [8, 16], strides = [1, 1]} : vector<8x64xf32> to vector<8x16xf32>
    %54 = vector.extract_strided_slice %15 {offsets = [0, 32], sizes = [16, 16], strides = [1, 1]} : vector<16x64xf32> to vector<16x16xf32>
    %55 = vector.extract_strided_slice %16 {offsets = [0, 32], sizes = [16, 16], strides = [1, 1]} : vector<16x64xbf16> to vector<16x16xbf16>
    %cst_29 = arith.constant dense<0.000000e+00> : vector<8x16xf32>
    %56 = tpu.matmul %53, %54, %cst_29 {dimension_numbers = #tpu.dot_dimension_numbers<[1], [1], [0], [0], [0, 0, 1, 0], [], []>} : vector<8x16xf32>, vector<16x16xf32>, vector<8x16xf32> -> vector<8x16xf32>
    %cst_30 = arith.constant dense<0xFF800000> : vector<8xf32>
    %57 = vector.multi_reduction <maximumf>, %56, %cst_30 [1] : vector<8x16xf32> to vector<8xf32>
    %58 = vector.shape_cast %57 : vector<8xf32> to vector<8x1xf32>
    %59 = vector.broadcast %58 : vector<8x1xf32> to vector<8x16xf32>
    %60 = arith.subf %56, %59 : vector<8x16xf32>
    %61 = math.exp %60 : vector<8x16xf32>
    %cst_31 = arith.constant dense<0.000000e+00> : vector<8xf32>
    %62 = vector.multi_reduction <add>, %61, %cst_31 [1] : vector<8x16xf32> to vector<8xf32>
    %63 = vector.shape_cast %62 : vector<8xf32> to vector<8x1xf32>
    %64 = tpu.reciprocal %63 : vector<8x1xf32> -> vector<8x1xf32>
    %65 = vector.broadcast %64 : vector<8x1xf32> to vector<8x16xf32>
    %66 = arith.mulf %61, %65 : vector<8x16xf32>
    %c0_32 = arith.constant 0 : index
    %c32 = arith.constant 32 : index
    %67 = vector.load %arg7[%c0_32, %c32] : memref<8x128xf32, #tpu.memory_space<vmem>>, vector<8x16xf32>
    tpu.vector_store %arg7[%c0_32, %c32], %66 {strides = array<i32>} : memref<8x128xf32, #tpu.memory_space<vmem>>, vector<8x16xf32>,
    %68 = arith.truncf %66 : vector<8x16xf32> to vector<8x16xbf16>
    %cst_33 = arith.constant dense<0.000000e+00> : vector<8x16xf32>
    %69 = tpu.matmul %68, %55, %cst_33 {dimension_numbers = #tpu.dot_dimension_numbers<[1], [0], [0], [1], [0, 0, 1, 1], [], []>} : vector<8x16xbf16>, vector<16x16xbf16>, vector<8x16xf32> -> vector<8x16xf32>
    %c0_34 = arith.constant 0 : index
    %c32_35 = arith.constant 32 : index
    %70 = vector.load %arg6[%c0_34, %c32_35] : memref<16x64xf32, #tpu.memory_space<vmem>>, vector<8x16xf32>
    tpu.vector_store %arg6[%c0_34, %c32_35], %69 {strides = array<i32>} : memref<16x64xf32, #tpu.memory_space<vmem>>, vector<8x16xf32>,
    %71 = vector.extract_strided_slice %14 {offsets = [0, 48], sizes = [8, 16], strides = [1, 1]} : vector<8x64xf32> to vector<8x16xf32>
    %72 = vector.extract_strided_slice %15 {offsets = [0, 48], sizes = [16, 16], strides = [1, 1]} : vector<16x64xf32> to vector<16x16xf32>
    %73 = vector.extract_strided_slice %16 {offsets = [0, 48], sizes = [16, 16], strides = [1, 1]} : vector<16x64xbf16> to vector<16x16xbf16>
    %cst_36 = arith.constant dense<0.000000e+00> : vector<8x16xf32>
    %74 = tpu.matmul %71, %72, %cst_36 {dimension_numbers = #tpu.dot_dimension_numbers<[1], [1], [0], [0], [0, 0, 1, 0], [], []>} : vector<8x16xf32>, vector<16x16xf32>, vector<8x16xf32> -> vector<8x16xf32>
    %cst_37 = arith.constant dense<0xFF800000> : vector<8xf32>
    %75 = vector.multi_reduction <maximumf>, %74, %cst_37 [1] : vector<8x16xf32> to vector<8xf32>
    %76 = vector.shape_cast %75 : vector<8xf32> to vector<8x1xf32>
    %77 = vector.broadcast %76 : vector<8x1xf32> to vector<8x16xf32>
    %78 = arith.subf %74, %77 : vector<8x16xf32>
    %79 = math.exp %78 : vector<8x16xf32>
    %cst_38 = arith.constant dense<0.000000e+00> : vector<8xf32>
    %80 = vector.multi_reduction <add>, %79, %cst_38 [1] : vector<8x16xf32> to vector<8xf32>
    %81 = vector.shape_cast %80 : vector<8xf32> to vector<8x1xf32>
    %82 = tpu.reciprocal %81 : vector<8x1xf32> -> vector<8x1xf32>
    %83 = vector.broadcast %82 : vector<8x1xf32> to vector<8x16xf32>
    %84 = arith.mulf %79, %83 : vector<8x16xf32>
    %c0_39 = arith.constant 0 : index
    %c48 = arith.constant 48 : index
    %85 = vector.load %arg7[%c0_39, %c48] : memref<8x128xf32, #tpu.memory_space<vmem>>, vector<8x16xf32>
    tpu.vector_store %arg7[%c0_39, %c48], %84 {strides = array<i32>} : memref<8x128xf32, #tpu.memory_space<vmem>>, vector<8x16xf32>,
    %86 = arith.truncf %84 : vector<8x16xf32> to vector<8x16xbf16>
    %cst_40 = arith.constant dense<0.000000e+00> : vector<8x16xf32>
    %87 = tpu.matmul %86, %73, %cst_40 {dimension_numbers = #tpu.dot_dimension_numbers<[1], [0], [0], [1], [0, 0, 1, 1], [], []>} : vector<8x16xbf16>, vector<16x16xbf16>, vector<8x16xf32> -> vector<8x16xf32>
    %c0_41 = arith.constant 0 : index
    %c48_42 = arith.constant 48 : index
    %88 = vector.load %arg6[%c0_41, %c48_42] : memref<16x64xf32, #tpu.memory_space<vmem>>, vector<8x16xf32>
    tpu.vector_store %arg6[%c0_41, %c48_42], %87 {strides = array<i32>} : memref<16x64xf32, #tpu.memory_space<vmem>>, vector<8x16xf32>,
    %89 = vector.extract_strided_slice %7 {offsets = [8, 0], sizes = [8, 64], strides = [1, 1]} : vector<16x64xf32> to vector<8x64xf32>
    %90 = vector.extract_strided_slice %2 {offsets = [16, 0], sizes = [16, 64], strides = [1, 1]} : vector<32x64xf32> to vector<16x64xf32>
    %91 = vector.extract_strided_slice %13 {offsets = [16, 0], sizes = [16, 64], strides = [1, 1]} : vector<32x64xbf16> to vector<16x64xbf16>
    %92 = vector.extract_strided_slice %89 {offsets = [0, 0], sizes = [8, 16], strides = [1, 1]} : vector<8x64xf32> to vector<8x16xf32>
    %93 = vector.extract_strided_slice %90 {offsets = [0, 0], sizes = [16, 16], strides = [1, 1]} : vector<16x64xf32> to vector<16x16xf32>
    %94 = vector.extract_strided_slice %91 {offsets = [0, 0], sizes = [16, 16], strides = [1, 1]} : vector<16x64xbf16> to vector<16x16xbf16>
    %cst_43 = arith.constant dense<0.000000e+00> : vector<8x16xf32>
    %95 = tpu.matmul %92, %93, %cst_43 {dimension_numbers = #tpu.dot_dimension_numbers<[1], [1], [0], [0], [0, 0, 1, 0], [], []>} : vector<8x16xf32>, vector<16x16xf32>, vector<8x16xf32> -> vector<8x16xf32>
    %cst_44 = arith.constant dense<0xFF800000> : vector<8xf32>
    %96 = vector.multi_reduction <maximumf>, %95, %cst_44 [1] : vector<8x16xf32> to vector<8xf32>
    %97 = vector.shape_cast %96 : vector<8xf32> to vector<8x1xf32>
    %98 = vector.broadcast %97 : vector<8x1xf32> to vector<8x16xf32>
    %99 = arith.subf %95, %98 : vector<8x16xf32>
    %100 = math.exp %99 : vector<8x16xf32>
    %cst_45 = arith.constant dense<0.000000e+00> : vector<8xf32>
    %101 = vector.multi_reduction <add>, %100, %cst_45 [1] : vector<8x16xf32> to vector<8xf32>
    %102 = vector.shape_cast %101 : vector<8xf32> to vector<8x1xf32>
    %103 = tpu.reciprocal %102 : vector<8x1xf32> -> vector<8x1xf32>
    %104 = vector.broadcast %103 : vector<8x1xf32> to vector<8x16xf32>
    %105 = arith.mulf %100, %104 : vector<8x16xf32>
    %c0_46 = arith.constant 0 : index
    %c64_47 = arith.constant 64 : index
    %106 = vector.load %arg7[%c0_46, %c64_47] : memref<8x128xf32, #tpu.memory_space<vmem>>, vector<8x16xf32>
    tpu.vector_store %arg7[%c0_46, %c64_47], %105 {strides = array<i32>} : memref<8x128xf32, #tpu.memory_space<vmem>>, vector<8x16xf32>,
    %107 = arith.truncf %105 : vector<8x16xf32> to vector<8x16xbf16>
    %cst_48 = arith.constant dense<0.000000e+00> : vector<8x16xf32>
    %108 = tpu.matmul %107, %94, %cst_48 {dimension_numbers = #tpu.dot_dimension_numbers<[1], [0], [0], [1], [0, 0, 1, 1], [], []>} : vector<8x16xbf16>, vector<16x16xbf16>, vector<8x16xf32> -> vector<8x16xf32>
    %c8 = arith.constant 8 : index
    %c0_49 = arith.constant 0 : index
    %109 = vector.load %arg6[%c8, %c0_49] : memref<16x64xf32, #tpu.memory_space<vmem>>, vector<8x16xf32>
    tpu.vector_store %arg6[%c8, %c0_49], %108 {strides = array<i32>} : memref<16x64xf32, #tpu.memory_space<vmem>>, vector<8x16xf32>,
    %110 = vector.extract_strided_slice %89 {offsets = [0, 16], sizes = [8, 16], strides = [1, 1]} : vector<8x64xf32> to vector<8x16xf32>
    %111 = vector.extract_strided_slice %90 {offsets = [0, 16], sizes = [16, 16], strides = [1, 1]} : vector<16x64xf32> to vector<16x16xf32>
    %112 = vector.extract_strided_slice %91 {offsets = [0, 16], sizes = [16, 16], strides = [1, 1]} : vector<16x64xbf16> to vector<16x16xbf16>
    %cst_50 = arith.constant dense<0.000000e+00> : vector<8x16xf32>
    %113 = tpu.matmul %110, %111, %cst_50 {dimension_numbers = #tpu.dot_dimension_numbers<[1], [1], [0], [0], [0, 0, 1, 0], [], []>} : vector<8x16xf32>, vector<16x16xf32>, vector<8x16xf32> -> vector<8x16xf32>
    %cst_51 = arith.constant dense<0xFF800000> : vector<8xf32>
    %114 = vector.multi_reduction <maximumf>, %113, %cst_51 [1] : vector<8x16xf32> to vector<8xf32>
    %115 = vector.shape_cast %114 : vector<8xf32> to vector<8x1xf32>
    %116 = vector.broadcast %115 : vector<8x1xf32> to vector<8x16xf32>
    %117 = arith.subf %113, %116 : vector<8x16xf32>
    %118 = math.exp %117 : vector<8x16xf32>
    %cst_52 = arith.constant dense<0.000000e+00> : vector<8xf32>
    %119 = vector.multi_reduction <add>, %118, %cst_52 [1] : vector<8x16xf32> to vector<8xf32>
    %120 = vector.shape_cast %119 : vector<8xf32> to vector<8x1xf32>
    %121 = tpu.reciprocal %120 : vector<8x1xf32> -> vector<8x1xf32>
    %122 = vector.broadcast %121 : vector<8x1xf32> to vector<8x16xf32>
    %123 = arith.mulf %118, %122 : vector<8x16xf32>
    %c0_53 = arith.constant 0 : index
    %c80 = arith.constant 80 : index
    %124 = vector.load %arg7[%c0_53, %c80] : memref<8x128xf32, #tpu.memory_space<vmem>>, vector<8x16xf32>
    tpu.vector_store %arg7[%c0_53, %c80], %123 {strides = array<i32>} : memref<8x128xf32, #tpu.memory_space<vmem>>, vector<8x16xf32>,
    %125 = arith.truncf %123 : vector<8x16xf32> to vector<8x16xbf16>
    %cst_54 = arith.constant dense<0.000000e+00> : vector<8x16xf32>
    %126 = tpu.matmul %125, %112, %cst_54 {dimension_numbers = #tpu.dot_dimension_numbers<[1], [0], [0], [1], [0, 0, 1, 1], [], []>} : vector<8x16xbf16>, vector<16x16xbf16>, vector<8x16xf32> -> vector<8x16xf32>
    %c8_55 = arith.constant 8 : index
    %c16_56 = arith.constant 16 : index
    %127 = vector.load %arg6[%c8_55, %c16_56] : memref<16x64xf32, #tpu.memory_space<vmem>>, vector<8x16xf32>
    tpu.vector_store %arg6[%c8_55, %c16_56], %126 {strides = array<i32>} : memref<16x64xf32, #tpu.memory_space<vmem>>, vector<8x16xf32>,
    %128 = vector.extract_strided_slice %89 {offsets = [0, 32], sizes = [8, 16], strides = [1, 1]} : vector<8x64xf32> to vector<8x16xf32>
    %129 = vector.extract_strided_slice %90 {offsets = [0, 32], sizes = [16, 16], strides = [1, 1]} : vector<16x64xf32> to vector<16x16xf32>
    %130 = vector.extract_strided_slice %91 {offsets = [0, 32], sizes = [16, 16], strides = [1, 1]} : vector<16x64xbf16> to vector<16x16xbf16>
    %cst_57 = arith.constant dense<0.000000e+00> : vector<8x16xf32>
    %131 = tpu.matmul %128, %129, %cst_57 {dimension_numbers = #tpu.dot_dimension_numbers<[1], [1], [0], [0], [0, 0, 1, 0], [], []>} : vector<8x16xf32>, vector<16x16xf32>, vector<8x16xf32> -> vector<8x16xf32>
    %cst_58 = arith.constant dense<0xFF800000> : vector<8xf32>
    %132 = vector.multi_reduction <maximumf>, %131, %cst_58 [1] : vector<8x16xf32> to vector<8xf32>
    %133 = vector.shape_cast %132 : vector<8xf32> to vector<8x1xf32>
    %134 = vector.broadcast %133 : vector<8x1xf32> to vector<8x16xf32>
    %135 = arith.subf %131, %134 : vector<8x16xf32>
    %136 = math.exp %135 : vector<8x16xf32>
    %cst_59 = arith.constant dense<0.000000e+00> : vector<8xf32>
    %137 = vector.multi_reduction <add>, %136, %cst_59 [1] : vector<8x16xf32> to vector<8xf32>
    %138 = vector.shape_cast %137 : vector<8xf32> to vector<8x1xf32>
    %139 = tpu.reciprocal %138 : vector<8x1xf32> -> vector<8x1xf32>
    %140 = vector.broadcast %139 : vector<8x1xf32> to vector<8x16xf32>
    %141 = arith.mulf %136, %140 : vector<8x16xf32>
    %c0_60 = arith.constant 0 : index
    %c96 = arith.constant 96 : index
    %142 = vector.load %arg7[%c0_60, %c96] : memref<8x128xf32, #tpu.memory_space<vmem>>, vector<8x16xf32>
    tpu.vector_store %arg7[%c0_60, %c96], %141 {strides = array<i32>} : memref<8x128xf32, #tpu.memory_space<vmem>>, vector<8x16xf32>,
    %143 = arith.truncf %141 : vector<8x16xf32> to vector<8x16xbf16>
    %cst_61 = arith.constant dense<0.000000e+00> : vector<8x16xf32>
    %144 = tpu.matmul %143, %130, %cst_61 {dimension_numbers = #tpu.dot_dimension_numbers<[1], [0], [0], [1], [0, 0, 1, 1], [], []>} : vector<8x16xbf16>, vector<16x16xbf16>, vector<8x16xf32> -> vector<8x16xf32>
    %c8_62 = arith.constant 8 : index
    %c32_63 = arith.constant 32 : index
    %145 = vector.load %arg6[%c8_62, %c32_63] : memref<16x64xf32, #tpu.memory_space<vmem>>, vector<8x16xf32>
    tpu.vector_store %arg6[%c8_62, %c32_63], %144 {strides = array<i32>} : memref<16x64xf32, #tpu.memory_space<vmem>>, vector<8x16xf32>,
    %146 = vector.extract_strided_slice %89 {offsets = [0, 48], sizes = [8, 16], strides = [1, 1]} : vector<8x64xf32> to vector<8x16xf32>
    %147 = vector.extract_strided_slice %90 {offsets = [0, 48], sizes = [16, 16], strides = [1, 1]} : vector<16x64xf32> to vector<16x16xf32>
    %148 = vector.extract_strided_slice %91 {offsets = [0, 48], sizes = [16, 16], strides = [1, 1]} : vector<16x64xbf16> to vector<16x16xbf16>
    %cst_64 = arith.constant dense<0.000000e+00> : vector<8x16xf32>
    %149 = tpu.matmul %146, %147, %cst_64 {dimension_numbers = #tpu.dot_dimension_numbers<[1], [1], [0], [0], [0, 0, 1, 0], [], []>} : vector<8x16xf32>, vector<16x16xf32>, vector<8x16xf32> -> vector<8x16xf32>
    %cst_65 = arith.constant dense<0xFF800000> : vector<8xf32>
    %150 = vector.multi_reduction <maximumf>, %149, %cst_65 [1] : vector<8x16xf32> to vector<8xf32>
    %151 = vector.shape_cast %150 : vector<8xf32> to vector<8x1xf32>
    %152 = vector.broadcast %151 : vector<8x1xf32> to vector<8x16xf32>
    %153 = arith.subf %149, %152 : vector<8x16xf32>
    %154 = math.exp %153 : vector<8x16xf32>
    %cst_66 = arith.constant dense<0.000000e+00> : vector<8xf32>
    %155 = vector.multi_reduction <add>, %154, %cst_66 [1] : vector<8x16xf32> to vector<8xf32>
    %156 = vector.shape_cast %155 : vector<8xf32> to vector<8x1xf32>
    %157 = tpu.reciprocal %156 : vector<8x1xf32> -> vector<8x1xf32>
    %158 = vector.broadcast %157 : vector<8x1xf32> to vector<8x16xf32>
    %159 = arith.mulf %154, %158 : vector<8x16xf32>
    %c0_67 = arith.constant 0 : index
    %c112 = arith.constant 112 : index
    %160 = vector.load %arg7[%c0_67, %c112] : memref<8x128xf32, #tpu.memory_space<vmem>>, vector<8x16xf32>
    tpu.vector_store %arg7[%c0_67, %c112], %159 {strides = array<i32>} : memref<8x128xf32, #tpu.memory_space<vmem>>, vector<8x16xf32>,
    %161 = arith.truncf %159 : vector<8x16xf32> to vector<8x16xbf16>
    %cst_68 = arith.constant dense<0.000000e+00> : vector<8x16xf32>
    %162 = tpu.matmul %161, %148, %cst_68 {dimension_numbers = #tpu.dot_dimension_numbers<[1], [0], [0], [1], [0, 0, 1, 1], [], []>} : vector<8x16xbf16>, vector<16x16xbf16>, vector<8x16xf32> -> vector<8x16xf32>
    %c8_69 = arith.constant 8 : index
    %c48_70 = arith.constant 48 : index
    %163 = vector.load %arg6[%c8_69, %c48_70] : memref<16x64xf32, #tpu.memory_space<vmem>>, vector<8x16xf32>
    tpu.vector_store %arg6[%c8_69, %c48_70], %162 {strides = array<i32>} : memref<16x64xf32, #tpu.memory_space<vmem>>, vector<8x16xf32>,
    return
  }
  func.func @transform_0(%arg0: i32) -> (i32, i32) {
    %c0_i32 = arith.constant 0 : i32
    %c0_i32_0 = arith.constant 0 : i32
    return %arg0, %c0_i32 : i32, i32
  }
  func.func @transform_1(%arg0: i32) -> (i32, i32) {
    %c0_i32 = arith.constant 0 : i32
    %c0_i32_0 = arith.constant 0 : i32
    return %arg0, %c0_i32 : i32, i32
  }
  func.func @transform_2(%arg0: i32) -> (i32, i32) {
    %c0_i32 = arith.constant 0 : i32
    %c0_i32_0 = arith.constant 0 : i32
    return %arg0, %c0_i32 : i32, i32
  }
  func.func @transform_3(%arg0: i32) -> (i32, i32) {
    %c0_i32 = arith.constant 0 : i32
    %c0_i32_0 = arith.constant 0 : i32
    %c0_i32_1 = arith.constant 0 : i32
    return %c0_i32, %c0_i32_0 : i32, i32
  }
  func.func @transform_4(%arg0: i32) -> (i32, i32) {
    %c0_i32 = arith.constant 0 : i32
    %c0_i32_0 = arith.constant 0 : i32
    %c0_i32_1 = arith.constant 0 : i32
    return %c0_i32, %c0_i32_0 : i32, i32
  }
  func.func @transform_5(%arg0: i32) -> (i32, i32) {
    %c0_i32 = arith.constant 0 : i32
    %c0_i32_0 = arith.constant 0 : i32
    return %arg0, %c0_i32 : i32, i32
  }
  func.func @transform_6(%arg0: i32) -> (i32, i32) {
    %c0_i32 = arith.constant 0 : i32
    %c0_i32_0 = arith.constant 0 : i32
    %c0_i32_1 = arith.constant 0 : i32
    return %c0_i32, %c0_i32_0 : i32, i32
  }
}

</mosaic_0001>

<llo_original>
// kernel: multi_attn_forward.1
$region0: #{multi_attn_forward.1}
  #allocation0 [shape = 'u32[]', space=smem, size = 0x4, offset = 0x4, fixed_abs, tag = 'smem constant byte address 0x4 - core index']
  #allocation1 [shape = 'u32[144,128]{1,0:T(1,128)}', space=vmem, size = 0x12000, scoped, tag = 'internal scratch']
  %s0 = inlined_call_operand.vmem [shape: bf16[32,16], index: 0, kind: input, shape index: {}]
  %s1 = inlined_call_operand.vmem [shape: bf16[16,16], index: 1, kind: input, shape index: {}]
  %s2 = inlined_call_operand.vmem [shape: bf16[32,24], index: 2, kind: input, shape index: {}]
  %s3 = inlined_call_operand.vmem [shape: bf16[16,128], index: 3, kind: input, shape index: {}]
  %s4 = inlined_call_operand.vmem [shape: bf16[24,64], index: 4, kind: input, shape index: {}]
  %s5 = inlined_call_operand.hbm [shape: f32[16,64], index: 5, kind: output, shape index: {0}]
  %s6 = inlined_call_operand.vmem [shape: f32[8,128], index: 6, kind: output, shape index: {1}]
  %7 = xla_tuple %s5, %s6
  %s8 = sld [smem:[#allocation0]]
  $region38: #{multi_attn_forward.1} parent=0
    _
  %s10 = ssub.s32 1, %s8
  %s11 = scalar_select 0, %s10, %s8
  $region1: #{multi_attn_forward.1} parent=0
    #allocation2 [shape = 'u8[8192]{0}', space=vmem, size = 0x2000, scoped, tag = 'output window, operand 0, single buffered']
    #allocation3 [shape = 's32[1]{0}', space=sflag, size = 0x4, scoped, tag = 'scoped memory for multi_attn_forward.1']
    %12 = vsyncpa [#allocation3], 0
    // Predicated region
    $region2: #{multi_attn_forward.1} parent=1 // pred_check
      _
    $region3: #{multi_attn_forward.1} parent=1 // pred_check_branch
      %14 = sbr.rel (0) target = $region5
    $region4: #{multi_attn_forward.1} parent=1 // pred_region
      _
    $region5: #{multi_attn_forward.1} parent=1 // pred_fallthru
      _
    // Predicated region
    $region6: #{multi_attn_forward.1} parent=1 // pred_check
      _
    $region7: #{multi_attn_forward.1} parent=1 // pred_check_branch
      %16 = sbr.rel (0) target = $region9
    $region8: #{multi_attn_forward.1} parent=1 // pred_region
      _
    $region9: #{multi_attn_forward.1} parent=1 // pred_fallthru
      _
    // Predicated region
    $region10: #{multi_attn_forward.1} parent=1 // pred_check
      _
    $region11: #{multi_attn_forward.1} parent=1 // pred_check_branch
      %18 = sbr.rel (0) target = $region13
    $region12: #{multi_attn_forward.1} parent=1 // pred_region
      _
    $region13: #{multi_attn_forward.1} parent=1 // pred_fallthru
      _
    // Predicated region
    $region14: #{multi_attn_forward.1} parent=1 // pred_check
      _
    $region15: #{multi_attn_forward.1} parent=1 // pred_check_branch
      %20 = sbr.rel (0) target = $region17
    $region16: #{multi_attn_forward.1} parent=1 // pred_region
      _
    $region17: #{multi_attn_forward.1} parent=1 // pred_fallthru
      _
    // Predicated region
    $region18: #{multi_attn_forward.1} parent=1 // pred_check
      _
    $region19: #{multi_attn_forward.1} parent=1 // pred_check_branch
      %22 = sbr.rel (0) target = $region21
    $region20: #{multi_attn_forward.1} parent=1 // pred_region
      _
    $region21: #{multi_attn_forward.1} parent=1 // pred_fallthru
      _
    %v24 = vld [vmem:[%s0] sm:$0xf]
    %v25 = vld [vmem:[%s0 + $0x4] sm:$0xf]
    %v26 = vld [vmem:[%s0 + $0x8] sm:$0xf]
    %v27 = vld [vmem:[%s0 + $0xc] sm:$0xf]
    %v28 = vld [vmem:[%s3] sm:$0xf]
    %v29 = vld [vmem:[%s3 + $0x4] sm:$0xf]
    %v34 = vunpack.c.l.b16 %v24
    %v35 = vunpack.c.l.b16 %v25
    %v36 = vunpack.c.l.b16 %v26
    %v37 = vunpack.c.l.b16 %v27
    %v38 = vpack.c.b16 %v35, %v34
    %v39 = vpack.c.b16 %v37, %v36
    %v42 = vunpack.c.l.b16 %v28
    %v43 = vunpack.c.l.b16 %v29
    %v44 = vpack.c.b16 %v43, %v42
    %vm46 = vcmask 130048
    %v48 = vsel %vm46, %v38, 0
    %v51 = vsel %vm46, %v39, 0
    %53 = vmatprep.subr.bf16.mxu0 0
    %54 = vmatpush1.bf16.msra.mxu0 0
    %55 = vmatprep.subr.bf16.mxu0 0
    %56 = vmatpush1.bf16.msra.mxu0 0
    %57 = vmatprep.subr.bf16.mxu0 0
    %58 = vmatpush1.bf16.msra.mxu0 0
    %59 = vmatprep.subr.bf16.mxu0 0
    %60 = vmatpush1.bf16.msra.mxu0 0
    %61 = vmatprep.subr.bf16.mxu0 0
    %62 = vmatpush1.bf16.msra.mxu0 0
    %63 = vmatprep.subr.bf16.mxu0 0
    %64 = vmatpush1.bf16.msra.mxu0 0
    %65 = vmatprep.subr.bf16.mxu0 0
    %66 = vmatpush1.bf16.msra.mxu0 0
    %67 = vmatprep.subr.bf16.mxu0 0
    %68 = vmatpush1.bf16.msra.mxu0 %v44
    %69 = vmatprep.subr.bf16.mxu0 0
    %70 = vmatpush2.bf16.msra.mxu0 0
    %71 = vmatprep.subr.bf16.mxu0 0
    %72 = vmatpush2.bf16.msra.mxu0 0
    %73 = vmatprep.subr.bf16.mxu0 0
    %74 = vmatpush2.bf16.msra.mxu0 0
    %75 = vmatprep.subr.bf16.mxu0 0
    %76 = vmatpush2.bf16.msra.mxu0 0
    %77 = vmatprep.subr.bf16.mxu0 0
    %78 = vmatpush2.bf16.msra.mxu0 0
    %79 = vmatprep.subr.bf16.mxu0 0
    %80 = vmatpush2.bf16.msra.mxu0 0
    %81 = vmatprep.subr.bf16.mxu0 0
    %82 = vmatpush2.bf16.msra.mxu0 0
    %83 = vmatprep.subr.bf16.mxu0 0
    %84 = vmatpush2.bf16.msra.mxu0 0
    %85 = vmatprep.mubr.bf16.mxu0 0
    %86 = vmatmul.mubr.bf16.gmra.mxu0 %v48
    %v87 = vpop.f32.mrf.mxu0
    %v88 = vadd.f32 0.0, %v87
    %v89 = vpop.f32.mrf.mxu0
    %v90 = vpop.f32.mrf.mxu0
    %v91 = vadd.f32 0.0, %v90
    %v92 = vpop.f32.mrf.mxu0
    %93 = vmatprep.mubr.bf16.mxu0 0
    %94 = vmatmul.mubr.bf16.gmra.mxu0 %v51
    %v95 = vpop.f32.mrf.mxu0
    %v96 = vadd.f32 0.0, %v95
    %v97 = vpop.f32.mrf.mxu0
    %v98 = vpop.f32.mrf.mxu0
    %v99 = vadd.f32 0.0, %v98
    %v100 = vpop.f32.mrf.mxu0
    %101 = vdwg.mxu0
    %v102 = vld [vmem:[%s1] sm:$0xf]
    %v103 = vld [vmem:[%s1 + $0x4] sm:$0xf]
    %v106 = vunpack.c.l.b16 %v102
    %v107 = vunpack.c.l.b16 %v103
    %v108 = vpack.c.b16 %v107, %v106
    %109 = vrot.lane.b32.xlu0 %v44, 64
    %v110 = vpop.permute.xlu0 %109
    %v113 = vsel %vm46, %v108, 0
    %115 = vmatprep.subr.bf16.mxu0 0
    %116 = vmatpush1.bf16.msra.mxu0 0
    %117 = vmatprep.subr.bf16.mxu0 0
    %118 = vmatpush1.bf16.msra.mxu0 0
    %119 = vmatprep.subr.bf16.mxu0 0
    %120 = vmatpush1.bf16.msra.mxu0 0
    %121 = vmatprep.subr.bf16.mxu0 0
    %122 = vmatpush1.bf16.msra.mxu0 0
    %123 = vmatprep.subr.bf16.mxu0 0
    %124 = vmatpush1.bf16.msra.mxu0 0
    %125 = vmatprep.subr.bf16.mxu0 0
    %126 = vmatpush1.bf16.msra.mxu0 0
    %127 = vmatprep.subr.bf16.mxu0 0
    %128 = vmatpush1.bf16.msra.mxu0 0
    %129 = vmatprep.subr.bf16.mxu0 0
    %130 = vmatpush1.bf16.msra.mxu0 %v110
    %131 = vmatprep.subr.bf16.mxu0 0
    %132 = vmatpush2.bf16.msra.mxu0 0
    %133 = vmatprep.subr.bf16.mxu0 0
    %134 = vmatpush2.bf16.msra.mxu0 0
    %135 = vmatprep.subr.bf16.mxu0 0
    %136 = vmatpush2.bf16.msra.mxu0 0
    %137 = vmatprep.subr.bf16.mxu0 0
    %138 = vmatpush2.bf16.msra.mxu0 0
    %139 = vmatprep.subr.bf16.mxu0 0
    %140 = vmatpush2.bf16.msra.mxu0 0
    %141 = vmatprep.subr.bf16.mxu0 0
    %142 = vmatpush2.bf16.msra.mxu0 0
    %143 = vmatprep.subr.bf16.mxu0 0
    %144 = vmatpush2.bf16.msra.mxu0 0
    %145 = vmatprep.subr.bf16.mxu0 0
    %146 = vmatpush2.bf16.msra.mxu0 0
    %147 = vmatprep.mubr.bf16.mxu0 0
    %148 = vmatmul.mubr.bf16.gmra.mxu0 %v113
    %v149 = vpop.f32.mrf.mxu0
    %v150 = vadd.f32 0.0, %v149
    %v151 = vpop.f32.mrf.mxu0
    %v152 = vpop.f32.mrf.mxu0
    %v153 = vadd.f32 0.0, %v152
    %v154 = vpop.f32.mrf.mxu0
    %155 = vdwg.mxu0
    %v156 = vmul.f32 %v150, 0.25
    %v157 = vmul.f32 %v153, 0.25
    %v158 = vld [vmem:[%s2] sm:$0xf]
    %v159 = vld [vmem:[%s2 + $0x4] sm:$0xf]
    %v160 = vld [vmem:[%s2 + $0x8] sm:$0xf]
    %v161 = vld [vmem:[%s2 + $0xc] sm:$0xf]
    %v162 = vld [vmem:[%s4] sm:$0xf]
    %v163 = vld [vmem:[%s4 + $0x4] sm:$0xf]
    %v164 = vld [vmem:[%s4 + $0x8] sm:$0xf]
    %v169 = vunpack.c.l.b16 %v158
    %v170 = vunpack.c.l.b16 %v159
    %v171 = vunpack.c.l.b16 %v160
    %v172 = vunpack.c.l.b16 %v161
    %v173 = vpack.c.b16 %v170, %v169
    %v174 = vpack.c.b16 %v172, %v171
    %v178 = vunpack.c.l.b16 %v162
    %v179 = vunpack.c.l.b16 %v163
    %v180 = vunpack.c.l.b16 %v164
    %v181 = vpack.c.b16 %v179, %v178
    %v182 = vpack.c.b16 %v180, %v180
    %vm184 = vcmask 195584
    %v186 = vsel %vm184, %v173, 0
    %v189 = vsel %vm184, %v174, 0
    %vm191 = vcmask 1043456
    %v193 = vsel %vm191, %v182, 0
    %195 = vmatprep.subr.bf16.mxu0 0
    %196 = vmatpush1.bf16.msra.mxu0 0
    %197 = vmatprep.subr.bf16.mxu0 0
    %198 = vmatpush1.bf16.msra.mxu0 0
    %199 = vmatprep.subr.bf16.mxu0 0
    %200 = vmatpush1.bf16.msra.mxu0 0
    %201 = vmatprep.subr.bf16.mxu0 0
    %202 = vmatpush1.bf16.msra.mxu0 0
    %203 = vmatprep.subr.bf16.mxu0 0
    %204 = vmatpush1.bf16.msra.mxu0 0
    %205 = vmatprep.subr.bf16.mxu0 0
    %206 = vmatpush1.bf16.msra.mxu0 0
    %207 = vmatprep.subr.bf16.mxu0 0
    %208 = vmatpush1.bf16.msra.mxu0 %v193
    %209 = vmatprep.subr.bf16.mxu0 0
    %210 = vmatpush1.bf16.msra.mxu0 %v181
    %211 = vmatprep.subr.bf16.mxu0 0
    %212 = vmatpush2.bf16.msra.mxu0 0
    %213 = vmatprep.subr.bf16.mxu0 0
    %214 = vmatpush2.bf16.msra.mxu0 0
    %215 = vmatprep.subr.bf16.mxu0 0
    %216 = vmatpush2.bf16.msra.mxu0 0
    %217 = vmatprep.subr.bf16.mxu0 0
    %218 = vmatpush2.bf16.msra.mxu0 0
    %219 = vmatprep.subr.bf16.mxu0 0
    %220 = vmatpush2.bf16.msra.mxu0 0
    %221 = vmatprep.subr.bf16.mxu0 0
    %222 = vmatpush2.bf16.msra.mxu0 0
    %223 = vmatprep.subr.bf16.mxu0 0
    %224 = vmatpush2.bf16.msra.mxu0 0
    %225 = vmatprep.subr.bf16.mxu0 0
    %226 = vmatpush2.bf16.msra.mxu0 0
    %227 = vmatprep.mubr.bf16.mxu0 0
    %228 = vmatmul.mubr.bf16.gmra.mxu0 %v186
    %v229 = vpop.f32.mrf.mxu0
    %v230 = vadd.f32 0.0, %v229
    %v231 = vpop.f32.mrf.mxu0
    %v232 = vpop.f32.mrf.mxu0
    %v233 = vadd.f32 0.0, %v232
    %v234 = vpop.f32.mrf.mxu0
    %235 = vmatprep.mubr.bf16.mxu0 0
    %236 = vmatmul.mubr.bf16.gmra.mxu0 %v189
    %v237 = vpop.f32.mrf.mxu0
    %v238 = vadd.f32 0.0, %v237
    %v239 = vpop.f32.mrf.mxu0
    %v240 = vpop.f32.mrf.mxu0
    %v241 = vadd.f32 0.0, %v240
    %v242 = vpop.f32.mrf.mxu0
    %243 = vdwg.mxu0
    %v244 = vmul.f32 %v230, 0.0625
    %v245 = vmul.f32 %v233, 0.0625
    %v246 = vmul.f32 %v238, 0.0625
    %v247 = vmul.f32 %v241, 0.0625
    %v248 = vpack.c.bf16 %v245, %v244
    %v249 = vpack.c.bf16 %v247, %v246
    %v251 = vsel %vm46, %v156, 0
    %v254 = vsel %vm46, %v88, 0
    %v257 = vsel %vm46, %v91, 0
    %259 = vmatprep.subr.mxu0 0.0
    %260 = vmatpush1.xpose.msra.mxu0 0.0
    %261 = vmatprep.subr.mxu0 0.0
    %262 = vmatpush1.xpose.msra.mxu0 0.0
    %263 = vmatprep.subr.mxu0 0.0
    %264 = vmatpush1.xpose.msra.mxu0 0.0
    %265 = vmatprep.subr.mxu0 0.0
    %266 = vmatpush1.xpose.msra.mxu0 0.0
    %267 = vmatprep.subr.mxu0 0.0
    %268 = vmatpush1.xpose.msra.mxu0 0.0
    %269 = vmatprep.subr.mxu0 0.0
    %270 = vmatpush1.xpose.msra.mxu0 0.0
    %271 = vmatprep.subr.mxu0 0.0
    %272 = vmatpush1.xpose.msra.mxu0 0.0
    %273 = vmatprep.subr.mxu0 0.0
    %274 = vmatpush1.xpose.msra.mxu0 0.0
    %275 = vmatprep.subr.mxu0 0.0
    %276 = vmatpush1.xpose.msra.mxu0 0.0
    %277 = vmatprep.subr.mxu0 0.0
    %278 = vmatpush1.xpose.msra.mxu0 0.0
    %279 = vmatprep.subr.mxu0 0.0
    %280 = vmatpush1.xpose.msra.mxu0 0.0
    %281 = vmatprep.subr.mxu0 0.0
    %282 = vmatpush1.xpose.msra.mxu0 0.0
    %283 = vmatprep.subr.mxu0 0.0
    %284 = vmatpush1.xpose.msra.mxu0 0.0
    %285 = vmatprep.subr.mxu0 0.0
    %286 = vmatpush1.xpose.msra.mxu0 0.0
    %287 = vmatprep.subr.mxu0 0.0
    %288 = vmatpush1.xpose.msra.mxu0 %v257
    %289 = vmatprep.subr.mxu0 0.0
    %290 = vmatpush1.xpose.msra.mxu0 %v254
    %291 = vmatprep.subr.mxu0 0.0
    %292 = vmatpush2.xpose.msra.mxu0 0.0
    %293 = vmatprep.subr.mxu0 0.0
    %294 = vmatpush2.xpose.msra.mxu0 0.0
    %295 = vmatprep.subr.mxu0 0.0
    %296 = vmatpush2.xpose.msra.mxu0 0.0
    %297 = vmatprep.subr.mxu0 0.0
    %298 = vmatpush2.xpose.msra.mxu0 0.0
    %299 = vmatprep.subr.mxu0 0.0
    %300 = vmatpush2.xpose.msra.mxu0 0.0
    %301 = vmatprep.subr.mxu0 0.0
    %302 = vmatpush2.xpose.msra.mxu0 0.0
    %303 = vmatprep.subr.mxu0 0.0
    %304 = vmatpush2.xpose.msra.mxu0 0.0
    %305 = vmatprep.subr.mxu0 0.0
    %306 = vmatpush2.xpose.msra.mxu0 0.0
    %307 = vmatprep.subr.mxu0 0.0
    %308 = vmatpush2.xpose.msra.mxu0 0.0
    %309 = vmatprep.subr.mxu0 0.0
    %310 = vmatpush2.xpose.msra.mxu0 0.0
    %311 = vmatprep.subr.mxu0 0.0
    %312 = vmatpush2.xpose.msra.mxu0 0.0
    %313 = vmatprep.subr.mxu0 0.0
    %314 = vmatpush2.xpose.msra.mxu0 0.0
    %315 = vmatprep.subr.mxu0 0.0
    %316 = vmatpush2.xpose.msra.mxu0 0.0
    %317 = vmatprep.subr.mxu0 0.0
    %318 = vmatpush2.xpose.msra.mxu0 0.0
    %319 = vmatprep.subr.mxu0 0.0
    %320 = vmatpush2.xpose.msra.mxu0 0.0
    %321 = vmatprep.subr.mxu0 0.0
    %322 = vmatpush2.xpose.msra.mxu0 0.0
    %323 = vmatprep.mubr.f32.mxu0 0.0
    %324 = vmatmul.mubr.f32.gmra.mxu0 %v251
    %v325 = vpop.f32.mrf.mxu0
    %v326 = vadd.f32 0.0, %v325
    %v327 = vpop.f32.mrf.mxu0
    %328 = vdwg.mxu0
    %v329 = vsel %vm46, %v326, -inf
    %330 = vmax.xlane.f32.xlu0 %v329
    %v331 = vpop.xlane.xlu0 %330
    %v332 = vsub.f32 %v326, %v331
    %v333 = vmul.f32 %v332, 1.442695
    %v334 = vpow.pop %v333
    %v335 = vsel %vm46, %v334, 0.0
    %336 = vadd.xlane.f32.xlu0 %v335
    %v337 = vpop.xlane.xlu0 %336
    %v338 = vrcp.pop %v337
    %v339 = vmul.f32 %v334, %v338
    %340 = vst.msk [vmem:[%s6] sm:$0xff] %vm46, %v339
    %v341 = vpack.c.bf16 %v339, %v339
    %v343 = vsel %vm46, %v341, 0
    %345 = vmatprep.subr.bf16.mxu0 0
    %346 = vmatpush1.bf16.msra.mxu0 0
    %347 = vmatprep.subr.bf16.mxu0 0
    %348 = vmatpush1.bf16.msra.mxu0 0
    %349 = vmatprep.subr.bf16.mxu0 0
    %350 = vmatpush1.bf16.msra.mxu0 0
    %351 = vmatprep.subr.bf16.mxu0 0
    %352 = vmatpush1.bf16.msra.mxu0 0
    %353 = vmatprep.subr.bf16.mxu0 0
    %354 = vmatpush1.bf16.msra.mxu0 0
    %355 = vmatprep.subr.bf16.mxu0 0
    %356 = vmatpush1.bf16.msra.mxu0 0
    %357 = vmatprep.subr.bf16.mxu0 0
    %358 = vmatpush1.bf16.msra.mxu0 0
    %359 = vmatprep.subr.bf16.mxu0 0
    %360 = vmatpush1.bf16.msra.mxu0 %v248
    %361 = vmatprep.subr.bf16.mxu0 0
    %362 = vmatpush2.bf16.msra.mxu0 0
    %363 = vmatprep.subr.bf16.mxu0 0
    %364 = vmatpush2.bf16.msra.mxu0 0
    %365 = vmatprep.subr.bf16.mxu0 0
    %366 = vmatpush2.bf16.msra.mxu0 0
    %367 = vmatprep.subr.bf16.mxu0 0
    %368 = vmatpush2.bf16.msra.mxu0 0
    %369 = vmatprep.subr.bf16.mxu0 0
    %370 = vmatpush2.bf16.msra.mxu0 0
    %371 = vmatprep.subr.bf16.mxu0 0
    %372 = vmatpush2.bf16.msra.mxu0 0
    %373 = vmatprep.subr.bf16.mxu0 0
    %374 = vmatpush2.bf16.msra.mxu0 0
    %375 = vmatprep.subr.bf16.mxu0 0
    %376 = vmatpush2.bf16.msra.mxu0 0
    %377 = vmatprep.mubr.bf16.mxu0 0
    %378 = vmatmul.mubr.bf16.gmra.mxu0 %v343
    %v379 = vpop.f32.mrf.mxu0
    %v380 = vadd.f32 0.0, %v379
    %v381 = vpop.f32.mrf.mxu0
    %v382 = vpop.f32.mrf.mxu0
    %v383 = vpop.f32.mrf.mxu0
    %384 = vdwg.mxu0
    %385 = vst.msk [vmem:[#allocation2] sm:$0xff] %vm46, %v380
    %386 = vrot.lane.b32.xlu0 %v156, 112
    %v387 = vpop.permute.xlu0 %386
    %388 = vrot.lane.b32.xlu0 %v88, 112
    %v389 = vpop.permute.xlu0 %388
    %390 = vrot.lane.b32.xlu0 %v91, 112
    %v391 = vpop.permute.xlu0 %390
    %v392 = vsel %vm46, %v387, 0
    %v394 = vsel %vm46, %v389, 0
    %v396 = vsel %vm46, %v391, 0
    %398 = vmatprep.subr.mxu0 0.0
    %399 = vmatpush1.xpose.msra.mxu0 0.0
    %400 = vmatprep.subr.mxu0 0.0
    %401 = vmatpush1.xpose.msra.mxu0 0.0
    %402 = vmatprep.subr.mxu0 0.0
    %403 = vmatpush1.xpose.msra.mxu0 0.0
    %404 = vmatprep.subr.mxu0 0.0
    %405 = vmatpush1.xpose.msra.mxu0 0.0
    %406 = vmatprep.subr.mxu0 0.0
    %407 = vmatpush1.xpose.msra.mxu0 0.0
    %408 = vmatprep.subr.mxu0 0.0
    %409 = vmatpush1.xpose.msra.mxu0 0.0
    %410 = vmatprep.subr.mxu0 0.0
    %411 = vmatpush1.xpose.msra.mxu0 0.0
    %412 = vmatprep.subr.mxu0 0.0
    %413 = vmatpush1.xpose.msra.mxu0 0.0
    %414 = vmatprep.subr.mxu0 0.0
    %415 = vmatpush1.xpose.msra.mxu0 0.0
    %416 = vmatprep.subr.mxu0 0.0
    %417 = vmatpush1.xpose.msra.mxu0 0.0
    %418 = vmatprep.subr.mxu0 0.0
    %419 = vmatpush1.xpose.msra.mxu0 0.0
    %420 = vmatprep.subr.mxu0 0.0
    %421 = vmatpush1.xpose.msra.mxu0 0.0
    %422 = vmatprep.subr.mxu0 0.0
    %423 = vmatpush1.xpose.msra.mxu0 0.0
    %424 = vmatprep.subr.mxu0 0.0
    %425 = vmatpush1.xpose.msra.mxu0 0.0
    %426 = vmatprep.subr.mxu0 0.0
    %427 = vmatpush1.xpose.msra.mxu0 %v396
    %428 = vmatprep.subr.mxu0 0.0
    %429 = vmatpush1.xpose.msra.mxu0 %v394
    %430 = vmatprep.subr.mxu0 0.0
    %431 = vmatpush2.xpose.msra.mxu0 0.0
    %432 = vmatprep.subr.mxu0 0.0
    %433 = vmatpush2.xpose.msra.mxu0 0.0
    %434 = vmatprep.subr.mxu0 0.0
    %435 = vmatpush2.xpose.msra.mxu0 0.0
    %436 = vmatprep.subr.mxu0 0.0
    %437 = vmatpush2.xpose.msra.mxu0 0.0
    %438 = vmatprep.subr.mxu0 0.0
    %439 = vmatpush2.xpose.msra.mxu0 0.0
    %440 = vmatprep.subr.mxu0 0.0
    %441 = vmatpush2.xpose.msra.mxu0 0.0
    %442 = vmatprep.subr.mxu0 0.0
    %443 = vmatpush2.xpose.msra.mxu0 0.0
    %444 = vmatprep.subr.mxu0 0.0
    %445 = vmatpush2.xpose.msra.mxu0 0.0
    %446 = vmatprep.subr.mxu0 0.0
    %447 = vmatpush2.xpose.msra.mxu0 0.0
    %448 = vmatprep.subr.mxu0 0.0
    %449 = vmatpush2.xpose.msra.mxu0 0.0
    %450 = vmatprep.subr.mxu0 0.0
    %451 = vmatpush2.xpose.msra.mxu0 0.0
    %452 = vmatprep.subr.mxu0 0.0
    %453 = vmatpush2.xpose.msra.mxu0 0.0
    %454 = vmatprep.subr.mxu0 0.0
    %455 = vmatpush2.xpose.msra.mxu0 0.0
    %456 = vmatprep.subr.mxu0 0.0
    %457 = vmatpush2.xpose.msra.mxu0 0.0
    %458 = vmatprep.subr.mxu0 0.0
    %459 = vmatpush2.xpose.msra.mxu0 0.0
    %460 = vmatprep.subr.mxu0 0.0
    %461 = vmatpush2.xpose.msra.mxu0 0.0
    %462 = vmatprep.mubr.f32.mxu0 0.0
    %463 = vmatmul.mubr.f32.gmra.mxu0 %v392
    %v464 = vpop.f32.mrf.mxu0
    %v465 = vadd.f32 0.0, %v464
    %v466 = vpop.f32.mrf.mxu0
    %467 = vdwg.mxu0
    %v468 = vsel %vm46, %v465, -inf
    %469 = vmax.xlane.f32.xlu0 %v468
    %v470 = vpop.xlane.xlu0 %469
    %v471 = vsub.f32 %v465, %v470
    %v472 = vmul.f32 %v471, 1.442695
    %v473 = vpow.pop %v472
    %v474 = vsel %vm46, %v473, 0.0
    %475 = vadd.xlane.f32.xlu0 %v474
    %v476 = vpop.xlane.xlu0 %475
    %v477 = vrcp.pop %v476
    %v478 = vmul.f32 %v473, %v477
    %480 = vrot.lane.b32.xlu0 %v478, 16
    %v481 = vpop.permute.xlu0 %480
    %vm483 = vcmask 261248
    %484 = vst.msk [vmem:[%s6] sm:$0xff] %vm483, %v481
    %v485 = vpack.c.bf16 %v478, %v478
    %487 = vrot.lane.b32.xlu0 %v248, 112
    %v488 = vpop.permute.xlu0 %487
    %v491 = vsel %vm46, %v485, 0
    %493 = vmatprep.subr.bf16.mxu0 0
    %494 = vmatpush1.bf16.msra.mxu0 0
    %495 = vmatprep.subr.bf16.mxu0 0
    %496 = vmatpush1.bf16.msra.mxu0 0
    %497 = vmatprep.subr.bf16.mxu0 0
    %498 = vmatpush1.bf16.msra.mxu0 0
    %499 = vmatprep.subr.bf16.mxu0 0
    %500 = vmatpush1.bf16.msra.mxu0 0
    %501 = vmatprep.subr.bf16.mxu0 0
    %502 = vmatpush1.bf16.msra.mxu0 0
    %503 = vmatprep.subr.bf16.mxu0 0
    %504 = vmatpush1.bf16.msra.mxu0 0
    %505 = vmatprep.subr.bf16.mxu0 0
    %506 = vmatpush1.bf16.msra.mxu0 0
    %507 = vmatprep.subr.bf16.mxu0 0
    %508 = vmatpush1.bf16.msra.mxu0 %v488
    %509 = vmatprep.subr.bf16.mxu0 0
    %510 = vmatpush2.bf16.msra.mxu0 0
    %511 = vmatprep.subr.bf16.mxu0 0
    %512 = vmatpush2.bf16.msra.mxu0 0
    %513 = vmatprep.subr.bf16.mxu0 0
    %514 = vmatpush2.bf16.msra.mxu0 0
    %515 = vmatprep.subr.bf16.mxu0 0
    %516 = vmatpush2.bf16.msra.mxu0 0
    %517 = vmatprep.subr.bf16.mxu0 0
    %518 = vmatpush2.bf16.msra.mxu0 0
    %519 = vmatprep.subr.bf16.mxu0 0
    %520 = vmatpush2.bf16.msra.mxu0 0
    %521 = vmatprep.subr.bf16.mxu0 0
    %522 = vmatpush2.bf16.msra.mxu0 0
    %523 = vmatprep.subr.bf16.mxu0 0
    %524 = vmatpush2.bf16.msra.mxu0 0
    %525 = vmatprep.mubr.bf16.mxu0 0
    %526 = vmatmul.mubr.bf16.gmra.mxu0 %v491
    %v527 = vpop.f32.mrf.mxu0
    %v528 = vadd.f32 0.0, %v527
    %v529 = vpop.f32.mrf.mxu0
    %v530 = vpop.f32.mrf.mxu0
    %v531 = vpop.f32.mrf.mxu0
    %532 = vdwg.mxu0
    %534 = vrot.lane.b32.xlu0 %v528, 16
    %v535 = vpop.permute.xlu0 %534
    %537 = vst.msk [vmem:[#allocation2] sm:$0xff] %vm483, %v535
    %538 = vrot.lane.b32.xlu0 %v156, 96
    %v539 = vpop.permute.xlu0 %538
    %540 = vrot.lane.b32.xlu0 %v88, 96
    %v541 = vpop.permute.xlu0 %540
    %542 = vrot.lane.b32.xlu0 %v91, 96
    %v543 = vpop.permute.xlu0 %542
    %v544 = vsel %vm46, %v539, 0
    %v546 = vsel %vm46, %v541, 0
    %v548 = vsel %vm46, %v543, 0
    %550 = vmatprep.subr.mxu0 0.0
    %551 = vmatpush1.xpose.msra.mxu0 0.0
    %552 = vmatprep.subr.mxu0 0.0
    %553 = vmatpush1.xpose.msra.mxu0 0.0
    %554 = vmatprep.subr.mxu0 0.0
    %555 = vmatpush1.xpose.msra.mxu0 0.0
    %556 = vmatprep.subr.mxu0 0.0
    %557 = vmatpush1.xpose.msra.mxu0 0.0
    %558 = vmatprep.subr.mxu0 0.0
    %559 = vmatpush1.xpose.msra.mxu0 0.0
    %560 = vmatprep.subr.mxu0 0.0
    %561 = vmatpush1.xpose.msra.mxu0 0.0
    %562 = vmatprep.subr.mxu0 0.0
    %563 = vmatpush1.xpose.msra.mxu0 0.0
    %564 = vmatprep.subr.mxu0 0.0
    %565 = vmatpush1.xpose.msra.mxu0 0.0
    %566 = vmatprep.subr.mxu0 0.0
    %567 = vmatpush1.xpose.msra.mxu0 0.0
    %568 = vmatprep.subr.mxu0 0.0
    %569 = vmatpush1.xpose.msra.mxu0 0.0
    %570 = vmatprep.subr.mxu0 0.0
    %571 = vmatpush1.xpose.msra.mxu0 0.0
    %572 = vmatprep.subr.mxu0 0.0
    %573 = vmatpush1.xpose.msra.mxu0 0.0
    %574 = vmatprep.subr.mxu0 0.0
    %575 = vmatpush1.xpose.msra.mxu0 0.0
    %576 = vmatprep.subr.mxu0 0.0
    %577 = vmatpush1.xpose.msra.mxu0 0.0
    %578 = vmatprep.subr.mxu0 0.0
    %579 = vmatpush1.xpose.msra.mxu0 %v548
    %580 = vmatprep.subr.mxu0 0.0
    %581 = vmatpush1.xpose.msra.mxu0 %v546
    %582 = vmatprep.subr.mxu0 0.0
    %583 = vmatpush2.xpose.msra.mxu0 0.0
    %584 = vmatprep.subr.mxu0 0.0
    %585 = vmatpush2.xpose.msra.mxu0 0.0
    %586 = vmatprep.subr.mxu0 0.0
    %587 = vmatpush2.xpose.msra.mxu0 0.0
    %588 = vmatprep.subr.mxu0 0.0
    %589 = vmatpush2.xpose.msra.mxu0 0.0
    %590 = vmatprep.subr.mxu0 0.0
    %591 = vmatpush2.xpose.msra.mxu0 0.0
    %592 = vmatprep.subr.mxu0 0.0
    %593 = vmatpush2.xpose.msra.mxu0 0.0
    %594 = vmatprep.subr.mxu0 0.0
    %595 = vmatpush2.xpose.msra.mxu0 0.0
    %596 = vmatprep.subr.mxu0 0.0
    %597 = vmatpush2.xpose.msra.mxu0 0.0
    %598 = vmatprep.subr.mxu0 0.0
    %599 = vmatpush2.xpose.msra.mxu0 0.0
    %600 = vmatprep.subr.mxu0 0.0
    %601 = vmatpush2.xpose.msra.mxu0 0.0
    %602 = vmatprep.subr.mxu0 0.0
    %603 = vmatpush2.xpose.msra.mxu0 0.0
    %604 = vmatprep.subr.mxu0 0.0
    %605 = vmatpush2.xpose.msra.mxu0 0.0
    %606 = vmatprep.subr.mxu0 0.0
    %607 = vmatpush2.xpose.msra.mxu0 0.0
    %608 = vmatprep.subr.mxu0 0.0
    %609 = vmatpush2.xpose.msra.mxu0 0.0
    %610 = vmatprep.subr.mxu0 0.0
    %611 = vmatpush2.xpose.msra.mxu0 0.0
    %612 = vmatprep.subr.mxu0 0.0
    %613 = vmatpush2.xpose.msra.mxu0 0.0
    %614 = vmatprep.mubr.f32.mxu0 0.0
    %615 = vmatmul.mubr.f32.gmra.mxu0 %v544
    %v616 = vpop.f32.mrf.mxu0
    %v617 = vadd.f32 0.0, %v616
    %v618 = vpop.f32.mrf.mxu0
    %619 = vdwg.mxu0
    %v620 = vsel %vm46, %v617, -inf
    %621 = vmax.xlane.f32.xlu0 %v620
    %v622 = vpop.xlane.xlu0 %621
    %v623 = vsub.f32 %v617, %v622
    %v624 = vmul.f32 %v623, 1.442695
    %v625 = vpow.pop %v624
    %v626 = vsel %vm46, %v625, 0.0
    %627 = vadd.xlane.f32.xlu0 %v626
    %v628 = vpop.xlane.xlu0 %627
    %v629 = vrcp.pop %v628
    %v630 = vmul.f32 %v625, %v629
    %632 = vrot.lane.b32.xlu0 %v630, 32
    %v633 = vpop.permute.xlu0 %632
    %vm635 = vcmask 392448
    %636 = vst.msk [vmem:[%s6] sm:$0xff] %vm635, %v633
    %v637 = vpack.c.bf16 %v630, %v630
    %638 = vrot.lane.b32.xlu0 %v248, 96
    %v639 = vpop.permute.xlu0 %638
    %v642 = vsel %vm46, %v637, 0
    %644 = vmatprep.subr.bf16.mxu0 0
    %645 = vmatpush1.bf16.msra.mxu0 0
    %646 = vmatprep.subr.bf16.mxu0 0
    %647 = vmatpush1.bf16.msra.mxu0 0
    %648 = vmatprep.subr.bf16.mxu0 0
    %649 = vmatpush1.bf16.msra.mxu0 0
    %650 = vmatprep.subr.bf16.mxu0 0
    %651 = vmatpush1.bf16.msra.mxu0 0
    %652 = vmatprep.subr.bf16.mxu0 0
    %653 = vmatpush1.bf16.msra.mxu0 0
    %654 = vmatprep.subr.bf16.mxu0 0
    %655 = vmatpush1.bf16.msra.mxu0 0
    %656 = vmatprep.subr.bf16.mxu0 0
    %657 = vmatpush1.bf16.msra.mxu0 0
    %658 = vmatprep.subr.bf16.mxu0 0
    %659 = vmatpush1.bf16.msra.mxu0 %v639
    %660 = vmatprep.subr.bf16.mxu0 0
    %661 = vmatpush2.bf16.msra.mxu0 0
    %662 = vmatprep.subr.bf16.mxu0 0
    %663 = vmatpush2.bf16.msra.mxu0 0
    %664 = vmatprep.subr.bf16.mxu0 0
    %665 = vmatpush2.bf16.msra.mxu0 0
    %666 = vmatprep.subr.bf16.mxu0 0
    %667 = vmatpush2.bf16.msra.mxu0 0
    %668 = vmatprep.subr.bf16.mxu0 0
    %669 = vmatpush2.bf16.msra.mxu0 0
    %670 = vmatprep.subr.bf16.mxu0 0
    %671 = vmatpush2.bf16.msra.mxu0 0
    %672 = vmatprep.subr.bf16.mxu0 0
    %673 = vmatpush2.bf16.msra.mxu0 0
    %674 = vmatprep.subr.bf16.mxu0 0
    %675 = vmatpush2.bf16.msra.mxu0 0
    %676 = vmatprep.mubr.bf16.mxu0 0
    %677 = vmatmul.mubr.bf16.gmra.mxu0 %v642
    %v678 = vpop.f32.mrf.mxu0
    %v679 = vadd.f32 0.0, %v678
    %v680 = vpop.f32.mrf.mxu0
    %v681 = vpop.f32.mrf.mxu0
    %v682 = vpop.f32.mrf.mxu0
    %683 = vdwg.mxu0
    %685 = vrot.lane.b32.xlu0 %v679, 32
    %v686 = vpop.permute.xlu0 %685
    %688 = vst.msk [vmem:[#allocation2] sm:$0xff] %vm635, %v686
    %689 = vrot.lane.b32.xlu0 %v156, 80
    %v690 = vpop.permute.xlu0 %689
    %691 = vrot.lane.b32.xlu0 %v88, 80
    %v692 = vpop.permute.xlu0 %691
    %693 = vrot.lane.b32.xlu0 %v91, 80
    %v694 = vpop.permute.xlu0 %693
    %v695 = vsel %vm46, %v690, 0
    %v697 = vsel %vm46, %v692, 0
    %v699 = vsel %vm46, %v694, 0
    %701 = vmatprep.subr.mxu0 0.0
    %702 = vmatpush1.xpose.msra.mxu0 0.0
    %703 = vmatprep.subr.mxu0 0.0
    %704 = vmatpush1.xpose.msra.mxu0 0.0
    %705 = vmatprep.subr.mxu0 0.0
    %706 = vmatpush1.xpose.msra.mxu0 0.0
    %707 = vmatprep.subr.mxu0 0.0
    %708 = vmatpush1.xpose.msra.mxu0 0.0
    %709 = vmatprep.subr.mxu0 0.0
    %710 = vmatpush1.xpose.msra.mxu0 0.0
    %711 = vmatprep.subr.mxu0 0.0
    %712 = vmatpush1.xpose.msra.mxu0 0.0
    %713 = vmatprep.subr.mxu0 0.0
    %714 = vmatpush1.xpose.msra.mxu0 0.0
    %715 = vmatprep.subr.mxu0 0.0
    %716 = vmatpush1.xpose.msra.mxu0 0.0
    %717 = vmatprep.subr.mxu0 0.0
    %718 = vmatpush1.xpose.msra.mxu0 0.0
    %719 = vmatprep.subr.mxu0 0.0
    %720 = vmatpush1.xpose.msra.mxu0 0.0
    %721 = vmatprep.subr.mxu0 0.0
    %722 = vmatpush1.xpose.msra.mxu0 0.0
    %723 = vmatprep.subr.mxu0 0.0
    %724 = vmatpush1.xpose.msra.mxu0 0.0
    %725 = vmatprep.subr.mxu0 0.0
    %726 = vmatpush1.xpose.msra.mxu0 0.0
    %727 = vmatprep.subr.mxu0 0.0
    %728 = vmatpush1.xpose.msra.mxu0 0.0
    %729 = vmatprep.subr.mxu0 0.0
    %730 = vmatpush1.xpose.msra.mxu0 %v699
    %731 = vmatprep.subr.mxu0 0.0
    %732 = vmatpush1.xpose.msra.mxu0 %v697
    %733 = vmatprep.subr.mxu0 0.0
    %734 = vmatpush2.xpose.msra.mxu0 0.0
    %735 = vmatprep.subr.mxu0 0.0
    %736 = vmatpush2.xpose.msra.mxu0 0.0
    %737 = vmatprep.subr.mxu0 0.0
    %738 = vmatpush2.xpose.msra.mxu0 0.0
    %739 = vmatprep.subr.mxu0 0.0
    %740 = vmatpush2.xpose.msra.mxu0 0.0
    %741 = vmatprep.subr.mxu0 0.0
    %742 = vmatpush2.xpose.msra.mxu0 0.0
    %743 = vmatprep.subr.mxu0 0.0
    %744 = vmatpush2.xpose.msra.mxu0 0.0
    %745 = vmatprep.subr.mxu0 0.0
    %746 = vmatpush2.xpose.msra.mxu0 0.0
    %747 = vmatprep.subr.mxu0 0.0
    %748 = vmatpush2.xpose.msra.mxu0 0.0
    %749 = vmatprep.subr.mxu0 0.0
    %750 = vmatpush2.xpose.msra.mxu0 0.0
    %751 = vmatprep.subr.mxu0 0.0
    %752 = vmatpush2.xpose.msra.mxu0 0.0
    %753 = vmatprep.subr.mxu0 0.0
    %754 = vmatpush2.xpose.msra.mxu0 0.0
    %755 = vmatprep.subr.mxu0 0.0
    %756 = vmatpush2.xpose.msra.mxu0 0.0
    %757 = vmatprep.subr.mxu0 0.0
    %758 = vmatpush2.xpose.msra.mxu0 0.0
    %759 = vmatprep.subr.mxu0 0.0
    %760 = vmatpush2.xpose.msra.mxu0 0.0
    %761 = vmatprep.subr.mxu0 0.0
    %762 = vmatpush2.xpose.msra.mxu0 0.0
    %763 = vmatprep.subr.mxu0 0.0
    %764 = vmatpush2.xpose.msra.mxu0 0.0
    %765 = vmatprep.mubr.f32.mxu0 0.0
    %766 = vmatmul.mubr.f32.gmra.mxu0 %v695
    %v767 = vpop.f32.mrf.mxu0
    %v768 = vadd.f32 0.0, %v767
    %v769 = vpop.f32.mrf.mxu0
    %770 = vdwg.mxu0
    %v771 = vsel %vm46, %v768, -inf
    %772 = vmax.xlane.f32.xlu0 %v771
    %v773 = vpop.xlane.xlu0 %772
    %v774 = vsub.f32 %v768, %v773
    %v775 = vmul.f32 %v774, 1.442695
    %v776 = vpow.pop %v775
    %v777 = vsel %vm46, %v776, 0.0
    %778 = vadd.xlane.f32.xlu0 %v777
    %v779 = vpop.xlane.xlu0 %778
    %v780 = vrcp.pop %v779
    %v781 = vmul.f32 %v776, %v780
    %783 = vrot.lane.b32.xlu0 %v781, 48
    %v784 = vpop.permute.xlu0 %783
    %vm786 = vcmask 523648
    %787 = vst.msk [vmem:[%s6] sm:$0xff] %vm786, %v784
    %v788 = vpack.c.bf16 %v781, %v781
    %789 = vrot.lane.b32.xlu0 %v248, 80
    %v790 = vpop.permute.xlu0 %789
    %v793 = vsel %vm46, %v788, 0
    %795 = vmatprep.subr.bf16.mxu0 0
    %796 = vmatpush1.bf16.msra.mxu0 0
    %797 = vmatprep.subr.bf16.mxu0 0
    %798 = vmatpush1.bf16.msra.mxu0 0
    %799 = vmatprep.subr.bf16.mxu0 0
    %800 = vmatpush1.bf16.msra.mxu0 0
    %801 = vmatprep.subr.bf16.mxu0 0
    %802 = vmatpush1.bf16.msra.mxu0 0
    %803 = vmatprep.subr.bf16.mxu0 0
    %804 = vmatpush1.bf16.msra.mxu0 0
    %805 = vmatprep.subr.bf16.mxu0 0
    %806 = vmatpush1.bf16.msra.mxu0 0
    %807 = vmatprep.subr.bf16.mxu0 0
    %808 = vmatpush1.bf16.msra.mxu0 0
    %809 = vmatprep.subr.bf16.mxu0 0
    %810 = vmatpush1.bf16.msra.mxu0 %v790
    %811 = vmatprep.subr.bf16.mxu0 0
    %812 = vmatpush2.bf16.msra.mxu0 0
    %813 = vmatprep.subr.bf16.mxu0 0
    %814 = vmatpush2.bf16.msra.mxu0 0
    %815 = vmatprep.subr.bf16.mxu0 0
    %816 = vmatpush2.bf16.msra.mxu0 0
    %817 = vmatprep.subr.bf16.mxu0 0
    %818 = vmatpush2.bf16.msra.mxu0 0
    %819 = vmatprep.subr.bf16.mxu0 0
    %820 = vmatpush2.bf16.msra.mxu0 0
    %821 = vmatprep.subr.bf16.mxu0 0
    %822 = vmatpush2.bf16.msra.mxu0 0
    %823 = vmatprep.subr.bf16.mxu0 0
    %824 = vmatpush2.bf16.msra.mxu0 0
    %825 = vmatprep.subr.bf16.mxu0 0
    %826 = vmatpush2.bf16.msra.mxu0 0
    %827 = vmatprep.mubr.bf16.mxu0 0
    %828 = vmatmul.mubr.bf16.gmra.mxu0 %v793
    %v829 = vpop.f32.mrf.mxu0
    %v830 = vadd.f32 0.0, %v829
    %v831 = vpop.f32.mrf.mxu0
    %v832 = vpop.f32.mrf.mxu0
    %v833 = vpop.f32.mrf.mxu0
    %834 = vdwg.mxu0
    %836 = vrot.lane.b32.xlu0 %v830, 48
    %v837 = vpop.permute.xlu0 %836
    %839 = vst.msk [vmem:[#allocation2] sm:$0xff] %vm786, %v837
    %v841 = vsel %vm46, %v157, 0
    %v844 = vsel %vm46, %v96, 0
    %v847 = vsel %vm46, %v99, 0
    %849 = vmatprep.subr.mxu0 0.0
    %850 = vmatpush1.xpose.msra.mxu0 0.0
    %851 = vmatprep.subr.mxu0 0.0
    %852 = vmatpush1.xpose.msra.mxu0 0.0
    %853 = vmatprep.subr.mxu0 0.0
    %854 = vmatpush1.xpose.msra.mxu0 0.0
    %855 = vmatprep.subr.mxu0 0.0
    %856 = vmatpush1.xpose.msra.mxu0 0.0
    %857 = vmatprep.subr.mxu0 0.0
    %858 = vmatpush1.xpose.msra.mxu0 0.0
    %859 = vmatprep.subr.mxu0 0.0
    %860 = vmatpush1.xpose.msra.mxu0 0.0
    %861 = vmatprep.subr.mxu0 0.0
    %862 = vmatpush1.xpose.msra.mxu0 0.0
    %863 = vmatprep.subr.mxu0 0.0
    %864 = vmatpush1.xpose.msra.mxu0 0.0
    %865 = vmatprep.subr.mxu0 0.0
    %866 = vmatpush1.xpose.msra.mxu0 0.0
    %867 = vmatprep.subr.mxu0 0.0
    %868 = vmatpush1.xpose.msra.mxu0 0.0
    %869 = vmatprep.subr.mxu0 0.0
    %870 = vmatpush1.xpose.msra.mxu0 0.0
    %871 = vmatprep.subr.mxu0 0.0
    %872 = vmatpush1.xpose.msra.mxu0 0.0
    %873 = vmatprep.subr.mxu0 0.0
    %874 = vmatpush1.xpose.msra.mxu0 0.0
    %875 = vmatprep.subr.mxu0 0.0
    %876 = vmatpush1.xpose.msra.mxu0 0.0
    %877 = vmatprep.subr.mxu0 0.0
    %878 = vmatpush1.xpose.msra.mxu0 %v847
    %879 = vmatprep.subr.mxu0 0.0
    %880 = vmatpush1.xpose.msra.mxu0 %v844
    %881 = vmatprep.subr.mxu0 0.0
    %882 = vmatpush2.xpose.msra.mxu0 0.0
    %883 = vmatprep.subr.mxu0 0.0
    %884 = vmatpush2.xpose.msra.mxu0 0.0
    %885 = vmatprep.subr.mxu0 0.0
    %886 = vmatpush2.xpose.msra.mxu0 0.0
    %887 = vmatprep.subr.mxu0 0.0
    %888 = vmatpush2.xpose.msra.mxu0 0.0
    %889 = vmatprep.subr.mxu0 0.0
    %890 = vmatpush2.xpose.msra.mxu0 0.0
    %891 = vmatprep.subr.mxu0 0.0
    %892 = vmatpush2.xpose.msra.mxu0 0.0
    %893 = vmatprep.subr.mxu0 0.0
    %894 = vmatpush2.xpose.msra.mxu0 0.0
    %895 = vmatprep.subr.mxu0 0.0
    %896 = vmatpush2.xpose.msra.mxu0 0.0
    %897 = vmatprep.subr.mxu0 0.0
    %898 = vmatpush2.xpose.msra.mxu0 0.0
    %899 = vmatprep.subr.mxu0 0.0
    %900 = vmatpush2.xpose.msra.mxu0 0.0
    %901 = vmatprep.subr.mxu0 0.0
    %902 = vmatpush2.xpose.msra.mxu0 0.0
    %903 = vmatprep.subr.mxu0 0.0
    %904 = vmatpush2.xpose.msra.mxu0 0.0
    %905 = vmatprep.subr.mxu0 0.0
    %906 = vmatpush2.xpose.msra.mxu0 0.0
    %907 = vmatprep.subr.mxu0 0.0
    %908 = vmatpush2.xpose.msra.mxu0 0.0
    %909 = vmatprep.subr.mxu0 0.0
    %910 = vmatpush2.xpose.msra.mxu0 0.0
    %911 = vmatprep.subr.mxu0 0.0
    %912 = vmatpush2.xpose.msra.mxu0 0.0
    %913 = vmatprep.mubr.f32.mxu0 0.0
    %914 = vmatmul.mubr.f32.gmra.mxu0 %v841
    %v915 = vpop.f32.mrf.mxu0
    %v916 = vadd.f32 0.0, %v915
    %v917 = vpop.f32.mrf.mxu0
    %918 = vdwg.mxu0
    %v919 = vsel %vm46, %v916, -inf
    %920 = vmax.xlane.f32.xlu0 %v919
    %v921 = vpop.xlane.xlu0 %920
    %v922 = vsub.f32 %v916, %v921
    %v923 = vmul.f32 %v922, 1.442695
    %v924 = vpow.pop %v923
    %v925 = vsel %vm46, %v924, 0.0
    %926 = vadd.xlane.f32.xlu0 %v925
    %v927 = vpop.xlane.xlu0 %926
    %v928 = vrcp.pop %v927
    %v929 = vmul.f32 %v924, %v928
    %931 = vrot.lane.b32.xlu0 %v929, 64
    %v932 = vpop.permute.xlu0 %931
    %vm934 = vcmask 654848
    %935 = vst.msk [vmem:[%s6] sm:$0xff] %vm934, %v932
    %v936 = vpack.c.bf16 %v929, %v929
    %v938 = vsel %vm46, %v936, 0
    %940 = vmatprep.subr.bf16.mxu0 0
    %941 = vmatpush1.bf16.msra.mxu0 0
    %942 = vmatprep.subr.bf16.mxu0 0
    %943 = vmatpush1.bf16.msra.mxu0 0
    %944 = vmatprep.subr.bf16.mxu0 0
    %945 = vmatpush1.bf16.msra.mxu0 0
    %946 = vmatprep.subr.bf16.mxu0 0
    %947 = vmatpush1.bf16.msra.mxu0 0
    %948 = vmatprep.subr.bf16.mxu0 0
    %949 = vmatpush1.bf16.msra.mxu0 0
    %950 = vmatprep.subr.bf16.mxu0 0
    %951 = vmatpush1.bf16.msra.mxu0 0
    %952 = vmatprep.subr.bf16.mxu0 0
    %953 = vmatpush1.bf16.msra.mxu0 0
    %954 = vmatprep.subr.bf16.mxu0 0
    %955 = vmatpush1.bf16.msra.mxu0 %v249
    %956 = vmatprep.subr.bf16.mxu0 0
    %957 = vmatpush2.bf16.msra.mxu0 0
    %958 = vmatprep.subr.bf16.mxu0 0
    %959 = vmatpush2.bf16.msra.mxu0 0
    %960 = vmatprep.subr.bf16.mxu0 0
    %961 = vmatpush2.bf16.msra.mxu0 0
    %962 = vmatprep.subr.bf16.mxu0 0
    %963 = vmatpush2.bf16.msra.mxu0 0
    %964 = vmatprep.subr.bf16.mxu0 0
    %965 = vmatpush2.bf16.msra.mxu0 0
    %966 = vmatprep.subr.bf16.mxu0 0
    %967 = vmatpush2.bf16.msra.mxu0 0
    %968 = vmatprep.subr.bf16.mxu0 0
    %969 = vmatpush2.bf16.msra.mxu0 0
    %970 = vmatprep.subr.bf16.mxu0 0
    %971 = vmatpush2.bf16.msra.mxu0 0
    %972 = vmatprep.mubr.bf16.mxu0 0
    %973 = vmatmul.mubr.bf16.gmra.mxu0 %v938
    %v974 = vpop.f32.mrf.mxu0
    %v975 = vadd.f32 0.0, %v974
    %v976 = vpop.f32.mrf.mxu0
    %v977 = vpop.f32.mrf.mxu0
    %v978 = vpop.f32.mrf.mxu0
    %979 = vdwg.mxu0
    %980 = vst.msk [vmem:[#allocation2 + $0x8] sm:$0xff] %vm46, %v975
    %981 = vrot.lane.b32.xlu0 %v157, 112
    %v982 = vpop.permute.xlu0 %981
    %983 = vrot.lane.b32.xlu0 %v96, 112
    %v984 = vpop.permute.xlu0 %983
    %985 = vrot.lane.b32.xlu0 %v99, 112
    %v986 = vpop.permute.xlu0 %985
    %v987 = vsel %vm46, %v982, 0
    %v989 = vsel %vm46, %v984, 0
    %v991 = vsel %vm46, %v986, 0
    %993 = vmatprep.subr.mxu0 0.0
    %994 = vmatpush1.xpose.msra.mxu0 0.0
    %995 = vmatprep.subr.mxu0 0.0
    %996 = vmatpush1.xpose.msra.mxu0 0.0
    %997 = vmatprep.subr.mxu0 0.0
    %998 = vmatpush1.xpose.msra.mxu0 0.0
    %999 = vmatprep.subr.mxu0 0.0
    %1000 = vmatpush1.xpose.msra.mxu0 0.0
    %1001 = vmatprep.subr.mxu0 0.0
    %1002 = vmatpush1.xpose.msra.mxu0 0.0
    %1003 = vmatprep.subr.mxu0 0.0
    %1004 = vmatpush1.xpose.msra.mxu0 0.0
    %1005 = vmatprep.subr.mxu0 0.0
    %1006 = vmatpush1.xpose.msra.mxu0 0.0
    %1007 = vmatprep.subr.mxu0 0.0
    %1008 = vmatpush1.xpose.msra.mxu0 0.0
    %1009 = vmatprep.subr.mxu0 0.0
    %1010 = vmatpush1.xpose.msra.mxu0 0.0
    %1011 = vmatprep.subr.mxu0 0.0
    %1012 = vmatpush1.xpose.msra.mxu0 0.0
    %1013 = vmatprep.subr.mxu0 0.0
    %1014 = vmatpush1.xpose.msra.mxu0 0.0
    %1015 = vmatprep.subr.mxu0 0.0
    %1016 = vmatpush1.xpose.msra.mxu0 0.0
    %1017 = vmatprep.subr.mxu0 0.0
    %1018 = vmatpush1.xpose.msra.mxu0 0.0
    %1019 = vmatprep.subr.mxu0 0.0
    %1020 = vmatpush1.xpose.msra.mxu0 0.0
    %1021 = vmatprep.subr.mxu0 0.0
    %1022 = vmatpush1.xpose.msra.mxu0 %v991
    %1023 = vmatprep.subr.mxu0 0.0
    %1024 = vmatpush1.xpose.msra.mxu0 %v989
    %1025 = vmatprep.subr.mxu0 0.0
    %1026 = vmatpush2.xpose.msra.mxu0 0.0
    %1027 = vmatprep.subr.mxu0 0.0
    %1028 = vmatpush2.xpose.msra.mxu0 0.0
    %1029 = vmatprep.subr.mxu0 0.0
    %1030 = vmatpush2.xpose.msra.mxu0 0.0
    %1031 = vmatprep.subr.mxu0 0.0
    %1032 = vmatpush2.xpose.msra.mxu0 0.0
    %1033 = vmatprep.subr.mxu0 0.0
    %1034 = vmatpush2.xpose.msra.mxu0 0.0
    %1035 = vmatprep.subr.mxu0 0.0
    %1036 = vmatpush2.xpose.msra.mxu0 0.0
    %1037 = vmatprep.subr.mxu0 0.0
    %1038 = vmatpush2.xpose.msra.mxu0 0.0
    %1039 = vmatprep.subr.mxu0 0.0
    %1040 = vmatpush2.xpose.msra.mxu0 0.0
    %1041 = vmatprep.subr.mxu0 0.0
    %1042 = vmatpush2.xpose.msra.mxu0 0.0
    %1043 = vmatprep.subr.mxu0 0.0
    %1044 = vmatpush2.xpose.msra.mxu0 0.0
    %1045 = vmatprep.subr.mxu0 0.0
    %1046 = vmatpush2.xpose.msra.mxu0 0.0
    %1047 = vmatprep.subr.mxu0 0.0
    %1048 = vmatpush2.xpose.msra.mxu0 0.0
    %1049 = vmatprep.subr.mxu0 0.0
    %1050 = vmatpush2.xpose.msra.mxu0 0.0
    %1051 = vmatprep.subr.mxu0 0.0
    %1052 = vmatpush2.xpose.msra.mxu0 0.0
    %1053 = vmatprep.subr.mxu0 0.0
    %1054 = vmatpush2.xpose.msra.mxu0 0.0
    %1055 = vmatprep.subr.mxu0 0.0
    %1056 = vmatpush2.xpose.msra.mxu0 0.0
    %1057 = vmatprep.mubr.f32.mxu0 0.0
    %1058 = vmatmul.mubr.f32.gmra.mxu0 %v987
    %v1059 = vpop.f32.mrf.mxu0
    %v1060 = vadd.f32 0.0, %v1059
    %v1061 = vpop.f32.mrf.mxu0
    %1062 = vdwg.mxu0
    %v1063 = vsel %vm46, %v1060, -inf
    %1064 = vmax.xlane.f32.xlu0 %v1063
    %v1065 = vpop.xlane.xlu0 %1064
    %v1066 = vsub.f32 %v1060, %v1065
    %v1067 = vmul.f32 %v1066, 1.442695
    %v1068 = vpow.pop %v1067
    %v1069 = vsel %vm46, %v1068, 0.0
    %1070 = vadd.xlane.f32.xlu0 %v1069
    %v1071 = vpop.xlane.xlu0 %1070
    %v1072 = vrcp.pop %v1071
    %v1073 = vmul.f32 %v1068, %v1072
    %1075 = vrot.lane.b32.xlu0 %v1073, 80
    %v1076 = vpop.permute.xlu0 %1075
    %vm1078 = vcmask 786048
    %1079 = vst.msk [vmem:[%s6] sm:$0xff] %vm1078, %v1076
    %v1080 = vpack.c.bf16 %v1073, %v1073
    %1082 = vrot.lane.b32.xlu0 %v249, 112
    %v1083 = vpop.permute.xlu0 %1082
    %v1086 = vsel %vm46, %v1080, 0
    %1088 = vmatprep.subr.bf16.mxu0 0
    %1089 = vmatpush1.bf16.msra.mxu0 0
    %1090 = vmatprep.subr.bf16.mxu0 0
    %1091 = vmatpush1.bf16.msra.mxu0 0
    %1092 = vmatprep.subr.bf16.mxu0 0
    %1093 = vmatpush1.bf16.msra.mxu0 0
    %1094 = vmatprep.subr.bf16.mxu0 0
    %1095 = vmatpush1.bf16.msra.mxu0 0
    %1096 = vmatprep.subr.bf16.mxu0 0
    %1097 = vmatpush1.bf16.msra.mxu0 0
    %1098 = vmatprep.subr.bf16.mxu0 0
    %1099 = vmatpush1.bf16.msra.mxu0 0
    %1100 = vmatprep.subr.bf16.mxu0 0
    %1101 = vmatpush1.bf16.msra.mxu0 0
    %1102 = vmatprep.subr.bf16.mxu0 0
    %1103 = vmatpush1.bf16.msra.mxu0 %v1083
    %1104 = vmatprep.subr.bf16.mxu0 0
    %1105 = vmatpush2.bf16.msra.mxu0 0
    %1106 = vmatprep.subr.bf16.mxu0 0
    %1107 = vmatpush2.bf16.msra.mxu0 0
    %1108 = vmatprep.subr.bf16.mxu0 0
    %1109 = vmatpush2.bf16.msra.mxu0 0
    %1110 = vmatprep.subr.bf16.mxu0 0
    %1111 = vmatpush2.bf16.msra.mxu0 0
    %1112 = vmatprep.subr.bf16.mxu0 0
    %1113 = vmatpush2.bf16.msra.mxu0 0
    %1114 = vmatprep.subr.bf16.mxu0 0
    %1115 = vmatpush2.bf16.msra.mxu0 0
    %1116 = vmatprep.subr.bf16.mxu0 0
    %1117 = vmatpush2.bf16.msra.mxu0 0
    %1118 = vmatprep.subr.bf16.mxu0 0
    %1119 = vmatpush2.bf16.msra.mxu0 0
    %1120 = vmatprep.mubr.bf16.mxu0 0
    %1121 = vmatmul.mubr.bf16.gmra.mxu0 %v1086
    %v1122 = vpop.f32.mrf.mxu0
    %v1123 = vadd.f32 0.0, %v1122
    %v1124 = vpop.f32.mrf.mxu0
    %v1125 = vpop.f32.mrf.mxu0
    %v1126 = vpop.f32.mrf.mxu0
    %1127 = vdwg.mxu0
    %1129 = vrot.lane.b32.xlu0 %v1123, 16
    %v1130 = vpop.permute.xlu0 %1129
    %1132 = vst.msk [vmem:[#allocation2 + $0x8] sm:$0xff] %vm483, %v1130
    %1133 = vrot.lane.b32.xlu0 %v157, 96
    %v1134 = vpop.permute.xlu0 %1133
    %1135 = vrot.lane.b32.xlu0 %v96, 96
    %v1136 = vpop.permute.xlu0 %1135
    %1137 = vrot.lane.b32.xlu0 %v99, 96
    %v1138 = vpop.permute.xlu0 %1137
    %v1139 = vsel %vm46, %v1134, 0
    %v1141 = vsel %vm46, %v1136, 0
    %v1143 = vsel %vm46, %v1138, 0
    %1145 = vmatprep.subr.mxu0 0.0
    %1146 = vmatpush1.xpose.msra.mxu0 0.0
    %1147 = vmatprep.subr.mxu0 0.0
    %1148 = vmatpush1.xpose.msra.mxu0 0.0
    %1149 = vmatprep.subr.mxu0 0.0
    %1150 = vmatpush1.xpose.msra.mxu0 0.0
    %1151 = vmatprep.subr.mxu0 0.0
    %1152 = vmatpush1.xpose.msra.mxu0 0.0
    %1153 = vmatprep.subr.mxu0 0.0
    %1154 = vmatpush1.xpose.msra.mxu0 0.0
    %1155 = vmatprep.subr.mxu0 0.0
    %1156 = vmatpush1.xpose.msra.mxu0 0.0
    %1157 = vmatprep.subr.mxu0 0.0
    %1158 = vmatpush1.xpose.msra.mxu0 0.0
    %1159 = vmatprep.subr.mxu0 0.0
    %1160 = vmatpush1.xpose.msra.mxu0 0.0
    %1161 = vmatprep.subr.mxu0 0.0
    %1162 = vmatpush1.xpose.msra.mxu0 0.0
    %1163 = vmatprep.subr.mxu0 0.0
    %1164 = vmatpush1.xpose.msra.mxu0 0.0
    %1165 = vmatprep.subr.mxu0 0.0
    %1166 = vmatpush1.xpose.msra.mxu0 0.0
    %1167 = vmatprep.subr.mxu0 0.0
    %1168 = vmatpush1.xpose.msra.mxu0 0.0
    %1169 = vmatprep.subr.mxu0 0.0
    %1170 = vmatpush1.xpose.msra.mxu0 0.0
    %1171 = vmatprep.subr.mxu0 0.0
    %1172 = vmatpush1.xpose.msra.mxu0 0.0
    %1173 = vmatprep.subr.mxu0 0.0
    %1174 = vmatpush1.xpose.msra.mxu0 %v1143
    %1175 = vmatprep.subr.mxu0 0.0
    %1176 = vmatpush1.xpose.msra.mxu0 %v1141
    %1177 = vmatprep.subr.mxu0 0.0
    %1178 = vmatpush2.xpose.msra.mxu0 0.0
    %1179 = vmatprep.subr.mxu0 0.0
    %1180 = vmatpush2.xpose.msra.mxu0 0.0
    %1181 = vmatprep.subr.mxu0 0.0
    %1182 = vmatpush2.xpose.msra.mxu0 0.0
    %1183 = vmatprep.subr.mxu0 0.0
    %1184 = vmatpush2.xpose.msra.mxu0 0.0
    %1185 = vmatprep.subr.mxu0 0.0
    %1186 = vmatpush2.xpose.msra.mxu0 0.0
    %1187 = vmatprep.subr.mxu0 0.0
    %1188 = vmatpush2.xpose.msra.mxu0 0.0
    %1189 = vmatprep.subr.mxu0 0.0
    %1190 = vmatpush2.xpose.msra.mxu0 0.0
    %1191 = vmatprep.subr.mxu0 0.0
    %1192 = vmatpush2.xpose.msra.mxu0 0.0
    %1193 = vmatprep.subr.mxu0 0.0
    %1194 = vmatpush2.xpose.msra.mxu0 0.0
    %1195 = vmatprep.subr.mxu0 0.0
    %1196 = vmatpush2.xpose.msra.mxu0 0.0
    %1197 = vmatprep.subr.mxu0 0.0
    %1198 = vmatpush2.xpose.msra.mxu0 0.0
    %1199 = vmatprep.subr.mxu0 0.0
    %1200 = vmatpush2.xpose.msra.mxu0 0.0
    %1201 = vmatprep.subr.mxu0 0.0
    %1202 = vmatpush2.xpose.msra.mxu0 0.0
    %1203 = vmatprep.subr.mxu0 0.0
    %1204 = vmatpush2.xpose.msra.mxu0 0.0
    %1205 = vmatprep.subr.mxu0 0.0
    %1206 = vmatpush2.xpose.msra.mxu0 0.0
    %1207 = vmatprep.subr.mxu0 0.0
    %1208 = vmatpush2.xpose.msra.mxu0 0.0
    %1209 = vmatprep.mubr.f32.mxu0 0.0
    %1210 = vmatmul.mubr.f32.gmra.mxu0 %v1139
    %v1211 = vpop.f32.mrf.mxu0
    %v1212 = vadd.f32 0.0, %v1211
    %v1213 = vpop.f32.mrf.mxu0
    %1214 = vdwg.mxu0
    %v1215 = vsel %vm46, %v1212, -inf
    %1216 = vmax.xlane.f32.xlu0 %v1215
    %v1217 = vpop.xlane.xlu0 %1216
    %v1218 = vsub.f32 %v1212, %v1217
    %v1219 = vmul.f32 %v1218, 1.442695
    %v1220 = vpow.pop %v1219
    %v1221 = vsel %vm46, %v1220, 0.0
    %1222 = vadd.xlane.f32.xlu0 %v1221
    %v1223 = vpop.xlane.xlu0 %1222
    %v1224 = vrcp.pop %v1223
    %v1225 = vmul.f32 %v1220, %v1224
    %1227 = vrot.lane.b32.xlu0 %v1225, 96
    %v1228 = vpop.permute.xlu0 %1227
    %vm1230 = vcmask 917248
    %1231 = vst.msk [vmem:[%s6] sm:$0xff] %vm1230, %v1228
    %v1232 = vpack.c.bf16 %v1225, %v1225
    %1233 = vrot.lane.b32.xlu0 %v249, 96
    %v1234 = vpop.permute.xlu0 %1233
    %v1237 = vsel %vm46, %v1232, 0
    %1239 = vmatprep.subr.bf16.mxu0 0
    %1240 = vmatpush1.bf16.msra.mxu0 0
    %1241 = vmatprep.subr.bf16.mxu0 0
    %1242 = vmatpush1.bf16.msra.mxu0 0
    %1243 = vmatprep.subr.bf16.mxu0 0
    %1244 = vmatpush1.bf16.msra.mxu0 0
    %1245 = vmatprep.subr.bf16.mxu0 0
    %1246 = vmatpush1.bf16.msra.mxu0 0
    %1247 = vmatprep.subr.bf16.mxu0 0
    %1248 = vmatpush1.bf16.msra.mxu0 0
    %1249 = vmatprep.subr.bf16.mxu0 0
    %1250 = vmatpush1.bf16.msra.mxu0 0
    %1251 = vmatprep.subr.bf16.mxu0 0
    %1252 = vmatpush1.bf16.msra.mxu0 0
    %1253 = vmatprep.subr.bf16.mxu0 0
    %1254 = vmatpush1.bf16.msra.mxu0 %v1234
    %1255 = vmatprep.subr.bf16.mxu0 0
    %1256 = vmatpush2.bf16.msra.mxu0 0
    %1257 = vmatprep.subr.bf16.mxu0 0
    %1258 = vmatpush2.bf16.msra.mxu0 0
    %1259 = vmatprep.subr.bf16.mxu0 0
    %1260 = vmatpush2.bf16.msra.mxu0 0
    %1261 = vmatprep.subr.bf16.mxu0 0
    %1262 = vmatpush2.bf16.msra.mxu0 0
    %1263 = vmatprep.subr.bf16.mxu0 0
    %1264 = vmatpush2.bf16.msra.mxu0 0
    %1265 = vmatprep.subr.bf16.mxu0 0
    %1266 = vmatpush2.bf16.msra.mxu0 0
    %1267 = vmatprep.subr.bf16.mxu0 0
    %1268 = vmatpush2.bf16.msra.mxu0 0
    %1269 = vmatprep.subr.bf16.mxu0 0
    %1270 = vmatpush2.bf16.msra.mxu0 0
    %1271 = vmatprep.mubr.bf16.mxu0 0
    %1272 = vmatmul.mubr.bf16.gmra.mxu0 %v1237
    %v1273 = vpop.f32.mrf.mxu0
    %v1274 = vadd.f32 0.0, %v1273
    %v1275 = vpop.f32.mrf.mxu0
    %v1276 = vpop.f32.mrf.mxu0
    %v1277 = vpop.f32.mrf.mxu0
    %1278 = vdwg.mxu0
    %1280 = vrot.lane.b32.xlu0 %v1274, 32
    %v1281 = vpop.permute.xlu0 %1280
    %1283 = vst.msk [vmem:[#allocation2 + $0x8] sm:$0xff] %vm635, %v1281
    %1284 = vrot.lane.b32.xlu0 %v157, 80
    %v1285 = vpop.permute.xlu0 %1284
    %1286 = vrot.lane.b32.xlu0 %v96, 80
    %v1287 = vpop.permute.xlu0 %1286
    %1288 = vrot.lane.b32.xlu0 %v99, 80
    %v1289 = vpop.permute.xlu0 %1288
    %v1290 = vsel %vm46, %v1285, 0
    %v1292 = vsel %vm46, %v1287, 0
    %v1294 = vsel %vm46, %v1289, 0
    %1296 = vmatprep.subr.mxu0 0.0
    %1297 = vmatpush1.xpose.msra.mxu0 0.0
    %1298 = vmatprep.subr.mxu0 0.0
    %1299 = vmatpush1.xpose.msra.mxu0 0.0
    %1300 = vmatprep.subr.mxu0 0.0
    %1301 = vmatpush1.xpose.msra.mxu0 0.0
    %1302 = vmatprep.subr.mxu0 0.0
    %1303 = vmatpush1.xpose.msra.mxu0 0.0
    %1304 = vmatprep.subr.mxu0 0.0
    %1305 = vmatpush1.xpose.msra.mxu0 0.0
    %1306 = vmatprep.subr.mxu0 0.0
    %1307 = vmatpush1.xpose.msra.mxu0 0.0
    %1308 = vmatprep.subr.mxu0 0.0
    %1309 = vmatpush1.xpose.msra.mxu0 0.0
    %1310 = vmatprep.subr.mxu0 0.0
    %1311 = vmatpush1.xpose.msra.mxu0 0.0
    %1312 = vmatprep.subr.mxu0 0.0
    %1313 = vmatpush1.xpose.msra.mxu0 0.0
    %1314 = vmatprep.subr.mxu0 0.0
    %1315 = vmatpush1.xpose.msra.mxu0 0.0
    %1316 = vmatprep.subr.mxu0 0.0
    %1317 = vmatpush1.xpose.msra.mxu0 0.0
    %1318 = vmatprep.subr.mxu0 0.0
    %1319 = vmatpush1.xpose.msra.mxu0 0.0
    %1320 = vmatprep.subr.mxu0 0.0
    %1321 = vmatpush1.xpose.msra.mxu0 0.0
    %1322 = vmatprep.subr.mxu0 0.0
    %1323 = vmatpush1.xpose.msra.mxu0 0.0
    %1324 = vmatprep.subr.mxu0 0.0
    %1325 = vmatpush1.xpose.msra.mxu0 %v1294
    %1326 = vmatprep.subr.mxu0 0.0
    %1327 = vmatpush1.xpose.msra.mxu0 %v1292
    %1328 = vmatprep.subr.mxu0 0.0
    %1329 = vmatpush2.xpose.msra.mxu0 0.0
    %1330 = vmatprep.subr.mxu0 0.0
    %1331 = vmatpush2.xpose.msra.mxu0 0.0
    %1332 = vmatprep.subr.mxu0 0.0
    %1333 = vmatpush2.xpose.msra.mxu0 0.0
    %1334 = vmatprep.subr.mxu0 0.0
    %1335 = vmatpush2.xpose.msra.mxu0 0.0
    %1336 = vmatprep.subr.mxu0 0.0
    %1337 = vmatpush2.xpose.msra.mxu0 0.0
    %1338 = vmatprep.subr.mxu0 0.0
    %1339 = vmatpush2.xpose.msra.mxu0 0.0
    %1340 = vmatprep.subr.mxu0 0.0
    %1341 = vmatpush2.xpose.msra.mxu0 0.0
    %1342 = vmatprep.subr.mxu0 0.0
    %1343 = vmatpush2.xpose.msra.mxu0 0.0
    %1344 = vmatprep.subr.mxu0 0.0
    %1345 = vmatpush2.xpose.msra.mxu0 0.0
    %1346 = vmatprep.subr.mxu0 0.0
    %1347 = vmatpush2.xpose.msra.mxu0 0.0
    %1348 = vmatprep.subr.mxu0 0.0
    %1349 = vmatpush2.xpose.msra.mxu0 0.0
    %1350 = vmatprep.subr.mxu0 0.0
    %1351 = vmatpush2.xpose.msra.mxu0 0.0
    %1352 = vmatprep.subr.mxu0 0.0
    %1353 = vmatpush2.xpose.msra.mxu0 0.0
    %1354 = vmatprep.subr.mxu0 0.0
    %1355 = vmatpush2.xpose.msra.mxu0 0.0
    %1356 = vmatprep.subr.mxu0 0.0
    %1357 = vmatpush2.xpose.msra.mxu0 0.0
    %1358 = vmatprep.subr.mxu0 0.0
    %1359 = vmatpush2.xpose.msra.mxu0 0.0
    %1360 = vmatprep.mubr.f32.mxu0 0.0
    %1361 = vmatmul.mubr.f32.gmra.mxu0 %v1290
    %v1362 = vpop.f32.mrf.mxu0
    %v1363 = vadd.f32 0.0, %v1362
    %v1364 = vpop.f32.mrf.mxu0
    %1365 = vdwg.mxu0
    %v1366 = vsel %vm46, %v1363, -inf
    %1367 = vmax.xlane.f32.xlu0 %v1366
    %v1368 = vpop.xlane.xlu0 %1367
    %v1369 = vsub.f32 %v1363, %v1368
    %v1370 = vmul.f32 %v1369, 1.442695
    %v1371 = vpow.pop %v1370
    %v1372 = vsel %vm46, %v1371, 0.0
    %1373 = vadd.xlane.f32.xlu0 %v1372
    %v1374 = vpop.xlane.xlu0 %1373
    %v1375 = vrcp.pop %v1374
    %v1376 = vmul.f32 %v1371, %v1375
    %1378 = vrot.lane.b32.xlu0 %v1376, 112
    %v1379 = vpop.permute.xlu0 %1378
    %vm1381 = vcmask 1048448
    %1382 = vst.msk [vmem:[%s6] sm:$0xff] %vm1381, %v1379
    %v1383 = vpack.c.bf16 %v1376, %v1376
    %1384 = vrot.lane.b32.xlu0 %v249, 80
    %v1385 = vpop.permute.xlu0 %1384
    %v1388 = vsel %vm46, %v1383, 0
    %1390 = vmatprep.subr.bf16.mxu0 0
    %1391 = vmatpush1.bf16.msra.mxu0 0
    %1392 = vmatprep.subr.bf16.mxu0 0
    %1393 = vmatpush1.bf16.msra.mxu0 0
    %1394 = vmatprep.subr.bf16.mxu0 0
    %1395 = vmatpush1.bf16.msra.mxu0 0
    %1396 = vmatprep.subr.bf16.mxu0 0
    %1397 = vmatpush1.bf16.msra.mxu0 0
    %1398 = vmatprep.subr.bf16.mxu0 0
    %1399 = vmatpush1.bf16.msra.mxu0 0
    %1400 = vmatprep.subr.bf16.mxu0 0
    %1401 = vmatpush1.bf16.msra.mxu0 0
    %1402 = vmatprep.subr.bf16.mxu0 0
    %1403 = vmatpush1.bf16.msra.mxu0 0
    %1404 = vmatprep.subr.bf16.mxu0 0
    %1405 = vmatpush1.bf16.msra.mxu0 %v1385
    %1406 = vmatprep.subr.bf16.mxu0 0
    %1407 = vmatpush2.bf16.msra.mxu0 0
    %1408 = vmatprep.subr.bf16.mxu0 0
    %1409 = vmatpush2.bf16.msra.mxu0 0
    %1410 = vmatprep.subr.bf16.mxu0 0
    %1411 = vmatpush2.bf16.msra.mxu0 0
    %1412 = vmatprep.subr.bf16.mxu0 0
    %1413 = vmatpush2.bf16.msra.mxu0 0
    %1414 = vmatprep.subr.bf16.mxu0 0
    %1415 = vmatpush2.bf16.msra.mxu0 0
    %1416 = vmatprep.subr.bf16.mxu0 0
    %1417 = vmatpush2.bf16.msra.mxu0 0
    %1418 = vmatprep.subr.bf16.mxu0 0
    %1419 = vmatpush2.bf16.msra.mxu0 0
    %1420 = vmatprep.subr.bf16.mxu0 0
    %1421 = vmatpush2.bf16.msra.mxu0 0
    %1422 = vmatprep.mubr.bf16.mxu0 0
    %1423 = vmatmul.mubr.bf16.gmra.mxu0 %v1388
    %v1424 = vpop.f32.mrf.mxu0
    %v1425 = vadd.f32 0.0, %v1424
    %v1426 = vpop.f32.mrf.mxu0
    %v1427 = vpop.f32.mrf.mxu0
    %v1428 = vpop.f32.mrf.mxu0
    %1429 = vdwg.mxu0
    %1431 = vrot.lane.b32.xlu0 %v1425, 48
    %v1432 = vpop.permute.xlu0 %1431
    %1434 = vst.msk [vmem:[#allocation2 + $0x8] sm:$0xff] %vm786, %v1432
    // Predicated region
    $region22: #{multi_attn_forward.1} parent=1 // pred_check
      _
    $region23: #{multi_attn_forward.1} parent=1 // pred_check_branch
      %1436 = sbr.rel (0) target = $region25
    $region24: #{multi_attn_forward.1} parent=1 // pred_region
      %s1438 = ssub.s32 256, 256
      %1439 = vsyncadd [#allocation3], %s1438
      %s1440 = sshll.u32 [#allocation2], 4
      %s1441 = int_to_ptr.vmem [resolvable:$true] %s1440
      %1446 = dma.vmem_to_hbm [thread:$0]  %s1441, 256, %s5, [#allocation3], 128, 128, 8
    $region25: #{multi_attn_forward.1} parent=1 // pred_fallthru
      _
    // Predicated region
    $region26: #{multi_attn_forward.1} parent=1 // pred_check
      _
    $region27: #{multi_attn_forward.1} parent=1 // pred_check_branch
      %1448 = sbr.rel (0) target = $region29
    $region28: #{multi_attn_forward.1} parent=1 // pred_region
      _
    $region29: #{multi_attn_forward.1} parent=1 // pred_fallthru
      _
    // Predicated region
    $region30: #{multi_attn_forward.1} parent=1 // pred_check
      _
    $region31: #{multi_attn_forward.1} parent=1 // pred_check_branch
      %1450 = sbr.rel (0) target = $region33
    $region32: #{multi_attn_forward.1} parent=1 // pred_region
      %1451 = dma.done [#allocation3], 256
    $region33: #{multi_attn_forward.1} parent=1 // pred_fallthru
      _
    // Predicated region
    $region34: #{multi_attn_forward.1} parent=1 // pred_check
      _
    $region35: #{multi_attn_forward.1} parent=1 // pred_check_branch
      %1453 = sbr.rel (0) target = $region37
    $region36: #{multi_attn_forward.1} parent=1 // pred_region
      _
    $region37: #{multi_attn_forward.1} parent=1 // pred_fallthru
      _
    %1454 = vsyncpa [#allocation3], 1

</llo_original>
